<compile_context>
chip_gen: v6e
topology: v6e:2x2x1
jax: 0.10.0
libtpu: 0.0.40
codegen_flags: <defaults>
</compile_context>

<pallas_src>
import math

import jax
import jax.numpy as jnp
import numpy as np
from jax import lax
from jax.experimental import pallas as pl
from jax.experimental.pallas import tpu as pltpu

EPS = 1e-5
NEG_SLOPE = 0.2          # DBlock uses LeakyReLU(negative_slope=0.2)
TM_DEFAULT = 1024        # target M rows per pass-1 tile (production default)
TR_TARGET = 2048         # target rows per pass-2 (elementwise) tile


def _round_up(a, b):
    return (a + b - 1) // b * b


def _vmem_limit_bytes():
    """Generation-aware scoped-VMEM budget (64 MiB on v7x, 128 MiB v5e/v6e)."""
    cap = 64 * 1024 * 1024                       # conservative fallback (v7x floor)
    try:
        cap = int(getattr(pltpu.get_tpu_info(), "vmem_capacity_bytes", cap))
    except Exception:
        pass
    return int(min(cap * 3 // 4, 96 * 1024 * 1024))


# ---------------------------------------------------------------------------
# Pass 1: conv-as-matmul (lane-dense output) + per-channel sum / sum(x^2).
# ---------------------------------------------------------------------------
def _conv_stats_kernel(p_ref, w_ref, conv_ref, sum_ref, ssq_ref):
    # p_ref:    (rt, g*K)  bf16  row-group-packed im2col patch tile
    # w_ref:    (g*K, L)   bf16  block-diagonal conv weights (L = g*OC lanes)
    # conv_ref: (rt, L)    bf16  lane-dense conv output tile
    # sum_ref:  (8, L)     f32   running per-slice sum      (accumulator output)
    # ssq_ref:  (8, L)     f32   running per-slice sum(x^2) (accumulator output)
    @pl.when(pl.program_id(1) == 0)
    def _():
        sum_ref[...] = jnp.zeros_like(sum_ref)
        ssq_ref[...] = jnp.zeros_like(ssq_ref)

    acc = jnp.dot(p_ref[...], w_ref[...], preferred_element_type=jnp.float32)
    conv_ref[...] = acc.astype(conv_ref.dtype)          # bf16 lane-dense store
    # Partial stats from the f32 accumulator as (8, L) vreg sums (VPU adds over
    # the leading axis); the sublane collapse + replica fold happen host-side.
    part = acc.reshape(acc.shape[0] // 8, 8, acc.shape[1])
    sum_ref[...] += jnp.sum(part, axis=0)
    ssq_ref[...] += jnp.sum(part * part, axis=0)


# ---------------------------------------------------------------------------
# Pass 2: y = leaky_relu(x * scale + shift) on the lane-dense bf16 view.
# ---------------------------------------------------------------------------
def _bn_lrelu_kernel(x_ref, scale_ref, shift_ref, o_ref):
    y = x_ref[...].astype(jnp.float32) * scale_ref[...] + shift_ref[...]
    o_ref[...] = jnp.where(y > 0, y, NEG_SLOPE * y).astype(o_ref.dtype)


def _im2col(x_pad_nhwc, kh, kw, stride):
    """(N, Hp, Wp, C) -> ((N*OH*OW), KH*KW*C); column order = (kh, kw, cin)."""
    n, hp, wp, c = x_pad_nhwc.shape
    oh = (hp - kh) // stride + 1
    ow = (wp - kw) // stride + 1
    cols = []
    for i in range(kh):
        for j in range(kw):
            cols.append(x_pad_nhwc[:, i:i + stride * (oh - 1) + 1:stride,
                                   j:j + stride * (ow - 1) + 1:stride, :])
    patches = jnp.stack(cols, axis=3)            # (N, OH, OW, KH*KW, C)
    return patches.reshape(n * oh * ow, kh * kw * c), (n, oh, ow)


def _conv_bn_lrelu_stage(x_nhwc, conv_w, gamma, beta, *, stride, pad,
                         block_m, out_dtype, vmem_limit):
    """One Conv2d(reflect pad, no bias) -> BatchNorm2d(train) -> LeakyReLU.

    x_nhwc: (N, H, W, Cin); conv_w: (OC, Cin, KH, KW).
    Returns (N, OH, OW, OC) in `out_dtype` (bf16 when feeding the next stage).
    """
    oc, cin, kh, kw = conv_w.shape

    x_bf16 = x_nhwc.astype(jnp.bfloat16)
    x_padded = jnp.pad(x_bf16, ((0, 0), (pad, pad), (pad, pad), (0, 0)),
                       mode="reflect")
    patches, (n, oh, ow) = _im2col(x_padded, kh, kw, stride)
    m, k = patches.shape

    # (OC, Cin, KH, KW) -> (KH*KW*Cin, OC), matching the im2col column order.
    w_mat = jnp.transpose(conv_w, (2, 3, 1, 0)).reshape(k, oc).astype(jnp.float32)
    # Conv bias intentionally NOT applied -- it cancels under batch-stat BN.

    # Lane-dense packing: g consecutive M rows share one 128-lane output row.
    # Realized by multiplying row-group-packed patches (M/g, g*K) with
    # block-diag(w_mat) (g*K, g*OC) so the matmul output is lane-dense by
    # construction (no in-kernel relayout, no masked stores, no host reshape).
    group = 128 // oc if (oc <= 128 and 128 % oc == 0) else 1
    lanes = group * oc
    w_big = jnp.kron(jnp.eye(group, dtype=jnp.float32), w_mat).astype(jnp.bfloat16)

    # Row quantum: bf16 blocks need the second-minor dim to be a multiple of 16.
    quant = 16 * group

    # M-tile rows, capped so double-buffered bf16 patches + conv-out tiles plus
    # the resident block-diagonal weights fit the per-generation VMEM budget.
    fixed = 4 * group * k * lanes + 16 * 8 * lanes + (1 << 20)
    tm_cap = (int(vmem_limit * 0.6) - fixed) // (4 * (k + oc))
    tm = min(block_m, max(quant, tm_cap), _round_up(m, quant))
    tm = max(quant, tm // quant * quant)

    n_tiles = pl.cdiv(m, tm)
    # Leading "parallel" axis shards the M range across v7x's two TensorCores
    # (per-slice stat accumulators); it's just loop order on 1-TC v5e/v6e.
    n_split = 2 if n_tiles >= 2 else 1
    tiles_per_split = pl.cdiv(n_tiles, n_split)
    m_pad = n_split * tiles_per_split * tm
    if m_pad != m:
        # Zero rows contribute 0 to sum/sumsq; stats divide by the true m.
        patches = jnp.pad(patches, ((0, m_pad - m), (0, 0)))

    rt = tm // group                              # conv-output rows per tile
    p_big = patches.reshape(m_pad // group, group * k)

    conv_flat, sums, ssqs = pl.pallas_call(
        _conv_stats_kernel,
        out_shape=(
            jax.ShapeDtypeStruct((m_pad // group, lanes), jnp.bfloat16),
            jax.ShapeDtypeStruct((n_split * 8, lanes), jnp.float32),
            jax.ShapeDtypeStruct((n_split * 8, lanes), jnp.float32),
        ),
        grid=(n_split, tiles_per_split),
        in_specs=[
            pl.BlockSpec((rt, group * k),
                         lambda c, i, t=tiles_per_split: (c * t + i, 0)),
            pl.BlockSpec((group * k, lanes), lambda c, i: (0, 0)),
        ],
        out_specs=(
            pl.BlockSpec((rt, lanes),
                         lambda c, i, t=tiles_per_split: (c * t + i, 0)),
            pl.BlockSpec((8, lanes), lambda c, i: (c, 0)),
            pl.BlockSpec((8, lanes), lambda c, i: (c, 0)),
        ),
        compiler_params=pltpu.CompilerParams(
            dimension_semantics=("parallel", "arbitrary"),
            vmem_limit_bytes=vmem_limit),
        cost_estimate=pl.CostEstimate(
            flops=2 * (m_pad // group) * (group * k) * lanes,
            transcendentals=0,
            bytes_accessed=(m_pad * k * 2 + group * k * lanes * 2
                            + (m_pad // group) * lanes * 2
                            + 4 * n_split * 8 * lanes * 4)),
    )(p_big, w_big)
    # TODO(synk): replace the host-side im2col materialization (KH*KW x input
    # bytes in HBM) with in-kernel halo DMA from the reflect-padded NHWC input.
    # TODO(synk): on v7x, optionally cast the patch stream to fp8 for the MXU.

    # Finalize training-mode batch stats (biased variance) host-side on a few
    # KB, and fold gamma/beta into a single per-channel scale/shift.
    tot_sum = jnp.sum(sums, axis=0).reshape(group, oc).sum(axis=0)
    tot_ssq = jnp.sum(ssqs, axis=0).reshape(group, oc).sum(axis=0)
    mean = tot_sum / m
    # TODO(synk): for very large M use a shifted / Welford-style accumulation;
    # E[x^2]-E[x]^2 in f32 is cancellation-prone.
    var = tot_ssq / m - mean * mean
    inv = lax.rsqrt(var + EPS)
    scale = gamma.astype(jnp.float32) * inv
    shift = beta.astype(jnp.float32) - mean * scale
    scale_row = jnp.tile(scale.reshape(1, oc), (1, group))   # lane l -> ch l%oc
    shift_row = jnp.tile(shift.reshape(1, oc), (1, group))

    # Pass 2: lane-dense bf16 in, affine+LeakyReLU in f32, out in `out_dtype`.
    rows = m_pad // group
    tr = min(TR_TARGET, rows)
    tr -= tr % 16
    cand = tr
    while rows % cand != 0:
        cand -= 16
    # Prefer an exact divisor (every store unmasked) unless it forces tiny tiles.
    tr = cand if cand >= min(tr, 512) else tr
    out_bytes = jnp.dtype(out_dtype).itemsize

    y_flat = pl.pallas_call(
        _bn_lrelu_kernel,
        out_shape=jax.ShapeDtypeStruct((rows, lanes), out_dtype),
        grid=(pl.cdiv(rows, tr),),
        in_specs=[
            pl.BlockSpec((tr, lanes), lambda i: (i, 0)),
            pl.BlockSpec((1, lanes), lambda i: (0, 0)),
            pl.BlockSpec((1, lanes), lambda i: (0, 0)),
        ],
        out_specs=pl.BlockSpec((tr, lanes), lambda i: (i, 0)),
        compiler_params=pltpu.CompilerParams(
            dimension_semantics=("parallel",),
            vmem_limit_bytes=vmem_limit),
        cost_estimate=pl.CostEstimate(
            flops=3 * rows * lanes,
            transcendentals=0,
            bytes_accessed=rows * lanes * (2 + out_bytes) + 2 * lanes * 4),
    )(conv_flat, scale_row, shift_row)

    y = y_flat.reshape(m_pad, oc)[:m]
    return y.reshape(n, oh, ow, oc)


def dblock_forward(x_nchw, conv1_w, conv2_w, bn_gamma, bn_beta, *,
                   block_m=TM_DEFAULT):
    """DBlock forward (training-mode BN, shared BN affine for both stages).

    Conv biases are omitted: they cancel exactly under batch-stat BN (NOT valid
    for eval-mode BN with running stats).  Returns NCHW like the PyTorch module.
    """
    vmem_limit = _vmem_limit_bytes()
    # TODO(synk): keep the whole graph NHWC (or gather straight from NCHW in an
    # in-kernel im2col) to drop both full-HBM layout-conversion passes.
    x_nhwc = jnp.transpose(x_nchw, (0, 2, 3, 1)).astype(jnp.float32)
    h = _conv_bn_lrelu_stage(x_nhwc, conv1_w, bn_gamma, bn_beta,
                             stride=2, pad=1, block_m=block_m,
                             out_dtype=jnp.bfloat16,   # feeds stage-2's bf16 im2col
                             vmem_limit=vmem_limit)
    h = _conv_bn_lrelu_stage(h, conv2_w, bn_gamma, bn_beta,
                             stride=1, pad=1, block_m=block_m,
                             out_dtype=jnp.float32,    # final stage stays f32
                             vmem_limit=vmem_limit)
    return jnp.transpose(h, (0, 3, 1, 2))


def dblock_reference(x, w1, b1, w2, b2, gamma, beta):
    """Pure-JAX f32 reference mirroring the PyTorch module in training mode
    (conv biases included -- they must cancel under batch-stat BN)."""
    def stage(h, w, b, stride):
        hp = jnp.pad(h, ((0, 0), (0, 0), (1, 1), (1, 1)), mode="reflect")
        c = lax.conv_general_dilated(
            hp, w.astype(jnp.float32), (stride, stride), "VALID",
            dimension_numbers=("NCHW", "OIHW", "NCHW"))
        c = c + b.reshape(1, -1, 1, 1)
        mean = jnp.mean(c, axis=(0, 2, 3), keepdims=True)
        var = jnp.mean((c - mean) ** 2, axis=(0, 2, 3), keepdims=True)
        y = ((c - mean) * lax.rsqrt(var + EPS) * gamma.reshape(1, -1, 1, 1)
             + beta.reshape(1, -1, 1, 1))
        return jnp.where(y > 0, y, NEG_SLOPE * y)

    h = stage(x.astype(jnp.float32), w1, b1, 2)
    return stage(h, w2, b2, 1)


if __name__ == "__main__":
    # Small shapes consistent with the module: batch=2, in_ch=4, out_ch=8,
    # kernel=3.  Spatial 40 (M = 800 rows per stage) so this toy run exercises
    # multi-tile stat accumulation, the 2-way core split, and zero-row M
    # padding with the OC=8 row quantum of 256 (production block_m is 1024).
    N, CIN, H, W = 2, 4, 40, 40
    OC, KS = 8, 3

    key = jax.random.PRNGKey(0)
    kx, kw1, kb1, kw2, kb2, kg, kbeta = jax.random.split(key, 7)
    x = jax.random.normal(kx, (N, CIN, H, W), dtype=jnp.float32)
    conv1_w = 0.1 * jax.random.normal(kw1, (OC, CIN, KS, KS), dtype=jnp.float32)
    conv1_b = 0.1 * jax.random.normal(kb1, (OC,), dtype=jnp.float32)
    conv2_w = 0.1 * jax.random.normal(kw2, (OC, OC, KS, KS), dtype=jnp.float32)
    conv2_b = 0.1 * jax.random.normal(kb2, (OC,), dtype=jnp.float32)
    bn_gamma = 1.0 + 0.1 * jax.random.normal(kg, (OC,), dtype=jnp.float32)
    bn_beta = 0.1 * jax.random.normal(kbeta, (OC,), dtype=jnp.float32)

    fwd = jax.jit(dblock_forward, static_argnames=("block_m",))
    out = jax.block_until_ready(
        fwd(x, conv1_w, conv2_w, bn_gamma, bn_beta, block_m=256))

    ref = dblock_reference(x, conv1_w, conv1_b, conv2_w, conv2_b,
                           bn_gamma, bn_beta)
    assert out.shape == (N, OC, H // 2, W // 2), out.shape
    # Tolerance covers bf16 MXU operands + bf16 intermediate / stage-handoff
    # storage across two conv+BN stages (accumulation and stats stay f32).
    np.testing.assert_allclose(np.asarray(out), np.asarray(ref),
                               atol=1e-1, rtol=1e-1)

    print("KERNEL_OK")
</pallas_src>

<mosaic_0001>
module attributes {stable_mosaic.version = 11 : i64} {
  func.func @_conv_stats_kernel(%arg0: i32, %arg1: i32, %arg2: memref<16x576xbf16, #tpu.memory_space<vmem>>, %arg3: memref<576x128xbf16, #tpu.memory_space<vmem>>, %arg4: memref<16x128xbf16, #tpu.memory_space<vmem>>, %arg5: memref<8x128xf32, #tpu.memory_space<vmem>>, %arg6: memref<8x128xf32, #tpu.memory_space<vmem>>) attributes {dimension_semantics = [#tpu.dimension_semantics<parallel>, #tpu.dimension_semantics<arbitrary>], iteration_bounds = array<i64: 2, 2>, scalar_prefetch = 0 : i64, scratch_operands = 0 : i64, tpu.core_type = #tpu.core_type<tc>, window_params = [{transform_indices = @transform_0, window_bounds = array<i64: 16, 576>}, {pipeline_mode = #tpu.pipeline_mode<synchronous>, transform_indices = @transform_1, window_bounds = array<i64: 576, 128>}, {transform_indices = @transform_2, window_bounds = array<i64: 16, 128>}, {transform_indices = @transform_3, window_bounds = array<i64: 8, 128>}, {transform_indices = @transform_4, window_bounds = array<i64: 8, 128>}]} {
    %c0_i32 = arith.constant 0 : i32
    %0 = arith.cmpi eq, %arg1, %c0_i32 : i32
    %1 = arith.extui %0 : i1 to i32
    %c0_i32_0 = arith.constant 0 : i32
    %2 = arith.cmpi ne, %1, %c0_i32_0 : i32
    scf.if %2 {
      %cst_16 = arith.constant 0.000000e+00 : f32
      %18 = vector.broadcast %cst_16 : f32 to vector<8x128xf32>
      %c0_17 = arith.constant 0 : index
      %c0_18 = arith.constant 0 : index
      %19 = vector.load %arg5[%c0_17, %c0_18] : memref<8x128xf32, #tpu.memory_space<vmem>>, vector<8x128xf32>
      tpu.vector_store %arg5[%c0_17, %c0_18], %18 {strides = array<i32>} : memref<8x128xf32, #tpu.memory_space<vmem>>, vector<8x128xf32>,
      %cst_19 = arith.constant 0.000000e+00 : f32
      %20 = vector.broadcast %cst_19 : f32 to vector<8x128xf32>
      %c0_20 = arith.constant 0 : index
      %c0_21 = arith.constant 0 : index
      %21 = vector.load %arg6[%c0_20, %c0_21] : memref<8x128xf32, #tpu.memory_space<vmem>>, vector<8x128xf32>
      tpu.vector_store %arg6[%c0_20, %c0_21], %20 {strides = array<i32>} : memref<8x128xf32, #tpu.memory_space<vmem>>, vector<8x128xf32>,
    } else {
    }
    %c0 = arith.constant 0 : index
    %c0_1 = arith.constant 0 : index
    %3 = vector.load %arg2[%c0, %c0_1] : memref<16x576xbf16, #tpu.memory_space<vmem>>, vector<16x576xbf16>
    %c0_2 = arith.constant 0 : index
    %c0_3 = arith.constant 0 : index
    %4 = vector.load %arg3[%c0_2, %c0_3] : memref<576x128xbf16, #tpu.memory_space<vmem>>, vector<576x128xbf16>
    %cst = arith.constant dense<0.000000e+00> : vector<16x128xf32>
    %5 = tpu.matmul %3, %4, %cst {dimension_numbers = #tpu.dot_dimension_numbers<[1], [0], [0], [1], [0, 0, 1, 1], [], []>} : vector<16x576xbf16>, vector<576x128xbf16>, vector<16x128xf32> -> vector<16x128xf32>
    %6 = arith.truncf %5 : vector<16x128xf32> to vector<16x128xbf16>
    %c0_4 = arith.constant 0 : index
    %c0_5 = arith.constant 0 : index
    %7 = vector.load %arg4[%c0_4, %c0_5] : memref<16x128xbf16, #tpu.memory_space<vmem>>, vector<16x128xbf16>
    tpu.vector_store %arg4[%c0_4, %c0_5], %6 {strides = array<i32>} : memref<16x128xbf16, #tpu.memory_space<vmem>>, vector<16x128xbf16>,
    %8 = vector.shape_cast %5 : vector<16x128xf32> to vector<2x8x128xf32>
    %c0_6 = arith.constant 0 : index
    %c0_7 = arith.constant 0 : index
    %9 = vector.load %arg5[%c0_6, %c0_7] : memref<8x128xf32, #tpu.memory_space<vmem>>, vector<8x128xf32>
    %cst_8 = arith.constant dense<0.000000e+00> : vector<8x128xf32>
    %10 = vector.multi_reduction <add>, %8, %cst_8 [0] : vector<2x8x128xf32> to vector<8x128xf32>
    %11 = arith.addf %9, %10 : vector<8x128xf32>
    %c0_9 = arith.constant 0 : index
    %c0_10 = arith.constant 0 : index
    %12 = vector.load %arg5[%c0_9, %c0_10] : memref<8x128xf32, #tpu.memory_space<vmem>>, vector<8x128xf32>
    tpu.vector_store %arg5[%c0_9, %c0_10], %11 {strides = array<i32>} : memref<8x128xf32, #tpu.memory_space<vmem>>, vector<8x128xf32>,
    %c0_11 = arith.constant 0 : index
    %c0_12 = arith.constant 0 : index
    %13 = vector.load %arg6[%c0_11, %c0_12] : memref<8x128xf32, #tpu.memory_space<vmem>>, vector<8x128xf32>
    %14 = arith.mulf %8, %8 : vector<2x8x128xf32>
    %cst_13 = arith.constant dense<0.000000e+00> : vector<8x128xf32>
    %15 = vector.multi_reduction <add>, %14, %cst_13 [0] : vector<2x8x128xf32> to vector<8x128xf32>
    %16 = arith.addf %13, %15 : vector<8x128xf32>
    %c0_14 = arith.constant 0 : index
    %c0_15 = arith.constant 0 : index
    %17 = vector.load %arg6[%c0_14, %c0_15] : memref<8x128xf32, #tpu.memory_space<vmem>>, vector<8x128xf32>
    tpu.vector_store %arg6[%c0_14, %c0_15], %16 {strides = array<i32>} : memref<8x128xf32, #tpu.memory_space<vmem>>, vector<8x128xf32>,
    return
  }
  func.func @transform_0(%arg0: i32, %arg1: i32) -> (i32, i32) {
    %c2_i32 = arith.constant 2 : i32
    %0 = arith.muli %arg0, %c2_i32 : i32
    %1 = arith.addi %0, %arg1 : i32
    %c0_i32 = arith.constant 0 : i32
    %c0_i32_0 = arith.constant 0 : i32
    return %1, %c0_i32 : i32, i32
  }
  func.func @transform_1(%arg0: i32, %arg1: i32) -> (i32, i32) {
    %c0_i32 = arith.constant 0 : i32
    %c0_i32_0 = arith.constant 0 : i32
    %c0_i32_1 = arith.constant 0 : i32
    return %c0_i32, %c0_i32_0 : i32, i32
  }
  func.func @transform_2(%arg0: i32, %arg1: i32) -> (i32, i32) {
    %c2_i32 = arith.constant 2 : i32
    %0 = arith.muli %arg0, %c2_i32 : i32
    %1 = arith.addi %0, %arg1 : i32
    %c0_i32 = arith.constant 0 : i32
    %c0_i32_0 = arith.constant 0 : i32
    return %1, %c0_i32 : i32, i32
  }
  func.func @transform_3(%arg0: i32, %arg1: i32) -> (i32, i32) {
    %c0_i32 = arith.constant 0 : i32
    %c0_i32_0 = arith.constant 0 : i32
    return %arg0, %c0_i32 : i32, i32
  }
  func.func @transform_4(%arg0: i32, %arg1: i32) -> (i32, i32) {
    %c0_i32 = arith.constant 0 : i32
    %c0_i32_0 = arith.constant 0 : i32
    return %arg0, %c0_i32 : i32, i32
  }
}

module attributes {stable_mosaic.version = 11 : i64} {
  func.func @_bn_lrelu_kernel(%arg0: i32, %arg1: memref<64x128xbf16, #tpu.memory_space<vmem>>, %arg2: memref<1x128xf32, #tpu.memory_space<vmem>>, %arg3: memref<1x128xf32, #tpu.memory_space<vmem>>, %arg4: memref<64x128xbf16, #tpu.memory_space<vmem>>) attributes {dimension_semantics = [#tpu.dimension_semantics<parallel>], iteration_bounds = array<i64: 1>, scalar_prefetch = 0 : i64, scratch_operands = 0 : i64, tpu.core_type = #tpu.core_type<tc>, window_params = [{transform_indices = @transform_0, window_bounds = array<i64: 64, 128>}, {pipeline_mode = #tpu.pipeline_mode<synchronous>, transform_indices = @transform_1, window_bounds = array<i64: 1, 128>}, {pipeline_mode = #tpu.pipeline_mode<synchronous>, transform_indices = @transform_2, window_bounds = array<i64: 1, 128>}, {transform_indices = @transform_3, window_bounds = array<i64: 64, 128>}]} {
    %c0 = arith.constant 0 : index
    %c0_0 = arith.constant 0 : index
    %0 = vector.load %arg1[%c0, %c0_0] : memref<64x128xbf16, #tpu.memory_space<vmem>>, vector<64x128xbf16>
    %1 = arith.extf %0 : vector<64x128xbf16> to vector<64x128xf32>
    %c0_1 = arith.constant 0 : index
    %c0_2 = arith.constant 0 : index
    %2 = vector.load %arg2[%c0_1, %c0_2] : memref<1x128xf32, #tpu.memory_space<vmem>>, vector<1x128xf32>
    %3 = vector.broadcast %2 : vector<1x128xf32> to vector<64x128xf32>
    %4 = arith.mulf %1, %3 : vector<64x128xf32>
    %c0_3 = arith.constant 0 : index
    %c0_4 = arith.constant 0 : index
    %5 = vector.load %arg3[%c0_3, %c0_4] : memref<1x128xf32, #tpu.memory_space<vmem>>, vector<1x128xf32>
    %6 = vector.broadcast %5 : vector<1x128xf32> to vector<64x128xf32>
    %7 = arith.addf %4, %6 : vector<64x128xf32>
    %cst = arith.constant 0.000000e+00 : f32
    %8 = vector.broadcast %cst : f32 to vector<64x128xf32>
    %9 = arith.cmpf ogt, %7, %8 : vector<64x128xf32>
    %cst_5 = arith.constant 2.000000e-01 : f32
    %10 = vector.broadcast %cst_5 : f32 to vector<64x128xf32>
    %11 = arith.mulf %10, %7 : vector<64x128xf32>
    %12 = arith.select %9, %7, %11 : vector<64x128xi1>, vector<64x128xf32>
    %13 = arith.truncf %12 : vector<64x128xf32> to vector<64x128xbf16>
    %c0_6 = arith.constant 0 : index
    %c0_7 = arith.constant 0 : index
    %14 = vector.load %arg4[%c0_6, %c0_7] : memref<64x128xbf16, #tpu.memory_space<vmem>>, vector<64x128xbf16>
    tpu.vector_store %arg4[%c0_6, %c0_7], %13 {strides = array<i32>} : memref<64x128xbf16, #tpu.memory_space<vmem>>, vector<64x128xbf16>,
    return
  }
  func.func @transform_0(%arg0: i32) -> (i32, i32) {
    %c0_i32 = arith.constant 0 : i32
    %c0_i32_0 = arith.constant 0 : i32
    return %arg0, %c0_i32 : i32, i32
  }
  func.func @transform_1(%arg0: i32) -> (i32, i32) {
    %c0_i32 = arith.constant 0 : i32
    %c0_i32_0 = arith.constant 0 : i32
    %c0_i32_1 = arith.constant 0 : i32
    return %c0_i32, %c0_i32_0 : i32, i32
  }
  func.func @transform_2(%arg0: i32) -> (i32, i32) {
    %c0_i32 = arith.constant 0 : i32
    %c0_i32_0 = arith.constant 0 : i32
    %c0_i32_1 = arith.constant 0 : i32
    return %c0_i32, %c0_i32_0 : i32, i32
  }
  func.func @transform_3(%arg0: i32) -> (i32, i32) {
    %c0_i32 = arith.constant 0 : i32
    %c0_i32_0 = arith.constant 0 : i32
    return %arg0, %c0_i32 : i32, i32
  }
}

module attributes {stable_mosaic.version = 11 : i64} {
  func.func @_conv_stats_kernel(%arg0: i32, %arg1: i32, %arg2: memref<16x1152xbf16, #tpu.memory_space<vmem>>, %arg3: memref<1152x128xbf16, #tpu.memory_space<vmem>>, %arg4: memref<16x128xbf16, #tpu.memory_space<vmem>>, %arg5: memref<8x128xf32, #tpu.memory_space<vmem>>, %arg6: memref<8x128xf32, #tpu.memory_space<vmem>>) attributes {dimension_semantics = [#tpu.dimension_semantics<parallel>, #tpu.dimension_semantics<arbitrary>], iteration_bounds = array<i64: 2, 2>, scalar_prefetch = 0 : i64, scratch_operands = 0 : i64, tpu.core_type = #tpu.core_type<tc>, window_params = [{transform_indices = @transform_0, window_bounds = array<i64: 16, 1152>}, {pipeline_mode = #tpu.pipeline_mode<synchronous>, transform_indices = @transform_1, window_bounds = array<i64: 1152, 128>}, {transform_indices = @transform_2, window_bounds = array<i64: 16, 128>}, {transform_indices = @transform_3, window_bounds = array<i64: 8, 128>}, {transform_indices = @transform_4, window_bounds = array<i64: 8, 128>}]} {
    %c0_i32 = arith.constant 0 : i32
    %0 = arith.cmpi eq, %arg1, %c0_i32 : i32
    %1 = arith.extui %0 : i1 to i32
    %c0_i32_0 = arith.constant 0 : i32
    %2 = arith.cmpi ne, %1, %c0_i32_0 : i32
    scf.if %2 {
      %cst_16 = arith.constant 0.000000e+00 : f32
      %18 = vector.broadcast %cst_16 : f32 to vector<8x128xf32>
      %c0_17 = arith.constant 0 : index
      %c0_18 = arith.constant 0 : index
      %19 = vector.load %arg5[%c0_17, %c0_18] : memref<8x128xf32, #tpu.memory_space<vmem>>, vector<8x128xf32>
      tpu.vector_store %arg5[%c0_17, %c0_18], %18 {strides = array<i32>} : memref<8x128xf32, #tpu.memory_space<vmem>>, vector<8x128xf32>,
      %cst_19 = arith.constant 0.000000e+00 : f32
      %20 = vector.broadcast %cst_19 : f32 to vector<8x128xf32>
      %c0_20 = arith.constant 0 : index
      %c0_21 = arith.constant 0 : index
      %21 = vector.load %arg6[%c0_20, %c0_21] : memref<8x128xf32, #tpu.memory_space<vmem>>, vector<8x128xf32>
      tpu.vector_store %arg6[%c0_20, %c0_21], %20 {strides = array<i32>} : memref<8x128xf32, #tpu.memory_space<vmem>>, vector<8x128xf32>,
    } else {
    }
    %c0 = arith.constant 0 : index
    %c0_1 = arith.constant 0 : index
    %3 = vector.load %arg2[%c0, %c0_1] : memref<16x1152xbf16, #tpu.memory_space<vmem>>, vector<16x1152xbf16>
    %c0_2 = arith.constant 0 : index
    %c0_3 = arith.constant 0 : index
    %4 = vector.load %arg3[%c0_2, %c0_3] : memref<1152x128xbf16, #tpu.memory_space<vmem>>, vector<1152x128xbf16>
    %cst = arith.constant dense<0.000000e+00> : vector<16x128xf32>
    %5 = tpu.matmul %3, %4, %cst {dimension_numbers = #tpu.dot_dimension_numbers<[1], [0], [0], [1], [0, 0, 1, 1], [], []>} : vector<16x1152xbf16>, vector<1152x128xbf16>, vector<16x128xf32> -> vector<16x128xf32>
    %6 = arith.truncf %5 : vector<16x128xf32> to vector<16x128xbf16>
    %c0_4 = arith.constant 0 : index
    %c0_5 = arith.constant 0 : index
    %7 = vector.load %arg4[%c0_4, %c0_5] : memref<16x128xbf16, #tpu.memory_space<vmem>>, vector<16x128xbf16>
    tpu.vector_store %arg4[%c0_4, %c0_5], %6 {strides = array<i32>} : memref<16x128xbf16, #tpu.memory_space<vmem>>, vector<16x128xbf16>,
    %8 = vector.shape_cast %5 : vector<16x128xf32> to vector<2x8x128xf32>
    %c0_6 = arith.constant 0 : index
    %c0_7 = arith.constant 0 : index
    %9 = vector.load %arg5[%c0_6, %c0_7] : memref<8x128xf32, #tpu.memory_space<vmem>>, vector<8x128xf32>
    %cst_8 = arith.constant dense<0.000000e+00> : vector<8x128xf32>
    %10 = vector.multi_reduction <add>, %8, %cst_8 [0] : vector<2x8x128xf32> to vector<8x128xf32>
    %11 = arith.addf %9, %10 : vector<8x128xf32>
    %c0_9 = arith.constant 0 : index
    %c0_10 = arith.constant 0 : index
    %12 = vector.load %arg5[%c0_9, %c0_10] : memref<8x128xf32, #tpu.memory_space<vmem>>, vector<8x128xf32>
    tpu.vector_store %arg5[%c0_9, %c0_10], %11 {strides = array<i32>} : memref<8x128xf32, #tpu.memory_space<vmem>>, vector<8x128xf32>,
    %c0_11 = arith.constant 0 : index
    %c0_12 = arith.constant 0 : index
    %13 = vector.load %arg6[%c0_11, %c0_12] : memref<8x128xf32, #tpu.memory_space<vmem>>, vector<8x128xf32>
    %14 = arith.mulf %8, %8 : vector<2x8x128xf32>
    %cst_13 = arith.constant dense<0.000000e+00> : vector<8x128xf32>
    %15 = vector.multi_reduction <add>, %14, %cst_13 [0] : vector<2x8x128xf32> to vector<8x128xf32>
    %16 = arith.addf %13, %15 : vector<8x128xf32>
    %c0_14 = arith.constant 0 : index
    %c0_15 = arith.constant 0 : index
    %17 = vector.load %arg6[%c0_14, %c0_15] : memref<8x128xf32, #tpu.memory_space<vmem>>, vector<8x128xf32>
    tpu.vector_store %arg6[%c0_14, %c0_15], %16 {strides = array<i32>} : memref<8x128xf32, #tpu.memory_space<vmem>>, vector<8x128xf32>,
    return
  }
  func.func @transform_0(%arg0: i32, %arg1: i32) -> (i32, i32) {
    %c2_i32 = arith.constant 2 : i32
    %0 = arith.muli %arg0, %c2_i32 : i32
    %1 = arith.addi %0, %arg1 : i32
    %c0_i32 = arith.constant 0 : i32
    %c0_i32_0 = arith.constant 0 : i32
    return %1, %c0_i32 : i32, i32
  }
  func.func @transform_1(%arg0: i32, %arg1: i32) -> (i32, i32) {
    %c0_i32 = arith.constant 0 : i32
    %c0_i32_0 = arith.constant 0 : i32
    %c0_i32_1 = arith.constant 0 : i32
    return %c0_i32, %c0_i32_0 : i32, i32
  }
  func.func @transform_2(%arg0: i32, %arg1: i32) -> (i32, i32) {
    %c2_i32 = arith.constant 2 : i32
    %0 = arith.muli %arg0, %c2_i32 : i32
    %1 = arith.addi %0, %arg1 : i32
    %c0_i32 = arith.constant 0 : i32
    %c0_i32_0 = arith.constant 0 : i32
    return %1, %c0_i32 : i32, i32
  }
  func.func @transform_3(%arg0: i32, %arg1: i32) -> (i32, i32) {
    %c0_i32 = arith.constant 0 : i32
    %c0_i32_0 = arith.constant 0 : i32
    return %arg0, %c0_i32 : i32, i32
  }
  func.func @transform_4(%arg0: i32, %arg1: i32) -> (i32, i32) {
    %c0_i32 = arith.constant 0 : i32
    %c0_i32_0 = arith.constant 0 : i32
    return %arg0, %c0_i32 : i32, i32
  }
}

module attributes {stable_mosaic.version = 11 : i64} {
  func.func @_bn_lrelu_kernel(%arg0: i32, %arg1: memref<64x128xbf16, #tpu.memory_space<vmem>>, %arg2: memref<1x128xf32, #tpu.memory_space<vmem>>, %arg3: memref<1x128xf32, #tpu.memory_space<vmem>>, %arg4: memref<64x128xf32, #tpu.memory_space<vmem>>) attributes {dimension_semantics = [#tpu.dimension_semantics<parallel>], iteration_bounds = array<i64: 1>, scalar_prefetch = 0 : i64, scratch_operands = 0 : i64, tpu.core_type = #tpu.core_type<tc>, window_params = [{transform_indices = @transform_0, window_bounds = array<i64: 64, 128>}, {pipeline_mode = #tpu.pipeline_mode<synchronous>, transform_indices = @transform_1, window_bounds = array<i64: 1, 128>}, {pipeline_mode = #tpu.pipeline_mode<synchronous>, transform_indices = @transform_2, window_bounds = array<i64: 1, 128>}, {transform_indices = @transform_3, window_bounds = array<i64: 64, 128>}]} {
    %c0 = arith.constant 0 : index
    %c0_0 = arith.constant 0 : index
    %0 = vector.load %arg1[%c0, %c0_0] : memref<64x128xbf16, #tpu.memory_space<vmem>>, vector<64x128xbf16>
    %1 = arith.extf %0 : vector<64x128xbf16> to vector<64x128xf32>
    %c0_1 = arith.constant 0 : index
    %c0_2 = arith.constant 0 : index
    %2 = vector.load %arg2[%c0_1, %c0_2] : memref<1x128xf32, #tpu.memory_space<vmem>>, vector<1x128xf32>
    %3 = vector.broadcast %2 : vector<1x128xf32> to vector<64x128xf32>
    %4 = arith.mulf %1, %3 : vector<64x128xf32>
    %c0_3 = arith.constant 0 : index
    %c0_4 = arith.constant 0 : index
    %5 = vector.load %arg3[%c0_3, %c0_4] : memref<1x128xf32, #tpu.memory_space<vmem>>, vector<1x128xf32>
    %6 = vector.broadcast %5 : vector<1x128xf32> to vector<64x128xf32>
    %7 = arith.addf %4, %6 : vector<64x128xf32>
    %cst = arith.constant 0.000000e+00 : f32
    %8 = vector.broadcast %cst : f32 to vector<64x128xf32>
    %9 = arith.cmpf ogt, %7, %8 : vector<64x128xf32>
    %cst_5 = arith.constant 2.000000e-01 : f32
    %10 = vector.broadcast %cst_5 : f32 to vector<64x128xf32>
    %11 = arith.mulf %10, %7 : vector<64x128xf32>
    %12 = arith.select %9, %7, %11 : vector<64x128xi1>, vector<64x128xf32>
    %c0_6 = arith.constant 0 : index
    %c0_7 = arith.constant 0 : index
    %13 = vector.load %arg4[%c0_6, %c0_7] : memref<64x128xf32, #tpu.memory_space<vmem>>, vector<64x128xf32>
    tpu.vector_store %arg4[%c0_6, %c0_7], %12 {strides = array<i32>} : memref<64x128xf32, #tpu.memory_space<vmem>>, vector<64x128xf32>,
    return
  }
  func.func @transform_0(%arg0: i32) -> (i32, i32) {
    %c0_i32 = arith.constant 0 : i32
    %c0_i32_0 = arith.constant 0 : i32
    return %arg0, %c0_i32 : i32, i32
  }
  func.func @transform_1(%arg0: i32) -> (i32, i32) {
    %c0_i32 = arith.constant 0 : i32
    %c0_i32_0 = arith.constant 0 : i32
    %c0_i32_1 = arith.constant 0 : i32
    return %c0_i32, %c0_i32_0 : i32, i32
  }
  func.func @transform_2(%arg0: i32) -> (i32, i32) {
    %c0_i32 = arith.constant 0 : i32
    %c0_i32_0 = arith.constant 0 : i32
    %c0_i32_1 = arith.constant 0 : i32
    return %c0_i32, %c0_i32_0 : i32, i32
  }
  func.func @transform_3(%arg0: i32) -> (i32, i32) {
    %c0_i32 = arith.constant 0 : i32
    %c0_i32_0 = arith.constant 0 : i32
    return %arg0, %c0_i32 : i32, i32
  }
}

</mosaic_0001>

<llo_original>
// kernel: mul.4
$region0: #{mul.4}
  %s0 = inlined_call_operand.vmem [shape: f32[3,3,4,8], index: 0, kind: input, shape index: {}]
  %s1 = inlined_call_operand.vmem [shape: f32[36,8], index: 1, kind: output, shape index: {}]
  $region1: #{mul.4} parent=0
    #allocation0 [shape = 'u8[36864]{0}', space=vmem, size = 0x9000, scoped, tag = 'scoped mem for input reshape']
    %s3 = sshll.u32 1, 4
    %s4 = ssub.s32 %s3, 1
    %s5 = smul.addr 4, 8
    %s6 = scalar_lea.vmem %s0, %s5
    %v7 = vld [vmem:[%s6] sm:%s4]
    %s8 = scalar_lea.vmem [#allocation0], 64
    %9 = vst [vmem:[%s8] sm:%s4] %v7
    %s10 = smul.addr 4, 7
    %s11 = scalar_lea.vmem %s0, %s10
    %v12 = vld [vmem:[%s11] sm:%s4]
    %s13 = scalar_lea.vmem [#allocation0], 56
    %14 = vst [vmem:[%s13] sm:%s4] %v12
    %s15 = smul.addr 4, 6
    %s16 = scalar_lea.vmem %s0, %s15
    %v17 = vld [vmem:[%s16] sm:%s4]
    %s18 = scalar_lea.vmem [#allocation0], 48
    %19 = vst [vmem:[%s18] sm:%s4] %v17
    %s20 = smul.addr 4, 5
    %s21 = scalar_lea.vmem %s0, %s20
    %v22 = vld [vmem:[%s21] sm:%s4]
    %s23 = scalar_lea.vmem [#allocation0], 40
    %24 = vst [vmem:[%s23] sm:%s4] %v22
    %s25 = smul.addr 4, 4
    %s26 = scalar_lea.vmem %s0, %s25
    %v27 = vld [vmem:[%s26] sm:%s4]
    %s28 = scalar_lea.vmem [#allocation0], 32
    %29 = vst [vmem:[%s28] sm:%s4] %v27
    %s30 = smul.addr 4, 3
    %s31 = scalar_lea.vmem %s0, %s30
    %v32 = vld [vmem:[%s31] sm:%s4]
    %s33 = scalar_lea.vmem [#allocation0], 24
    %34 = vst [vmem:[%s33] sm:%s4] %v32
    %s35 = smul.addr 4, 2
    %s36 = scalar_lea.vmem %s0, %s35
    %v37 = vld [vmem:[%s36] sm:%s4]
    %s38 = scalar_lea.vmem [#allocation0], 16
    %39 = vst [vmem:[%s38] sm:%s4] %v37
    %s40 = scalar_lea.vmem %s0, 4
    %v41 = vld [vmem:[%s40] sm:%s4]
    %s42 = scalar_lea.vmem [#allocation0], 8
    %43 = vst [vmem:[%s42] sm:%s4] %v41
    %v44 = vld [vmem:[%s0] sm:%s4]
    %45 = vst [vmem:[#allocation0] sm:%s4] %v44
    %v46 = vld [vmem:[#allocation0] sm:$0xf]
    %vm47 = vcmask 64512
    %48 = vst.msk [vmem:[%s1] sm:$0xf] %vm47, %v46
    %s49 = scalar_lea.vmem [#allocation0], 8
    %v50 = vld [vmem:[%s49] sm:$0xf]
    %vm51 = vcmask 64512
    %s52 = scalar_lea.vmem %s1, 4
    %53 = vst.msk [vmem:[%s52] sm:$0xf] %vm51, %v50
    %s54 = scalar_lea.vmem [#allocation0], 16
    %v55 = vld [vmem:[%s54] sm:$0xf]
    %vm56 = vcmask 64512
    %s57 = scalar_lea.vmem %s1, 8
    %58 = vst.msk [vmem:[%s57] sm:$0xf] %vm56, %v55
    %s59 = scalar_lea.vmem [#allocation0], 24
    %v60 = vld [vmem:[%s59] sm:$0xf]
    %vm61 = vcmask 64512
    %s62 = scalar_lea.vmem %s1, 12
    %63 = vst.msk [vmem:[%s62] sm:$0xf] %vm61, %v60
    %s64 = scalar_lea.vmem [#allocation0], 32
    %v65 = vld [vmem:[%s64] sm:$0xf]
    %vm66 = vcmask 64512
    %s67 = scalar_lea.vmem %s1, 16
    %68 = vst.msk [vmem:[%s67] sm:$0xf] %vm66, %v65
    %s69 = scalar_lea.vmem [#allocation0], 40
    %v70 = vld [vmem:[%s69] sm:$0xf]
    %vm71 = vcmask 64512
    %s72 = scalar_lea.vmem %s1, 20
    %73 = vst.msk [vmem:[%s72] sm:$0xf] %vm71, %v70
    %s74 = scalar_lea.vmem [#allocation0], 48
    %v75 = vld [vmem:[%s74] sm:$0xf]
    %vm76 = vcmask 64512
    %s77 = scalar_lea.vmem %s1, 24
    %78 = vst.msk [vmem:[%s77] sm:$0xf] %vm76, %v75
    %s79 = scalar_lea.vmem [#allocation0], 56
    %v80 = vld [vmem:[%s79] sm:$0xf]
    %vm81 = vcmask 64512
    %s82 = scalar_lea.vmem %s1, 28
    %83 = vst.msk [vmem:[%s82] sm:$0xf] %vm81, %v80
    %s84 = scalar_lea.vmem [#allocation0], 64
    %v85 = vld [vmem:[%s84] sm:$0xf]
    %vm86 = vcmask 64512
    %s87 = scalar_lea.vmem %s1, 32
    %88 = vst.msk [vmem:[%s87] sm:$0xf] %vm86, %v85

// kernel: dblock_forward.4
$region0: #{dblock_forward.4}
  #allocation0 [shape = 'u32[]', space=smem, size = 0x4, offset = 0x4, fixed_abs, tag = 'smem constant byte address 0x4 - core index']
  #allocation1 [shape = 'u32[144,128]{1,0:T(1,128)}', space=vmem, size = 0x12000, scoped, tag = 'internal scratch']
  %s0 = inlined_call_operand.vmem [shape: bf16[64,576], index: 0, kind: input, shape index: {}]
  %s1 = inlined_call_operand.vmem [shape: bf16[576,128], index: 1, kind: input, shape index: {}]
  %s2 = inlined_call_operand.vmem [shape: bf16[64,128], index: 2, kind: output, shape index: {0}]
  %s3 = inlined_call_operand.vmem [shape: f32[16,128], index: 3, kind: output, shape index: {1}]
  %s4 = inlined_call_operand.vmem [shape: f32[16,128], index: 4, kind: output, shape index: {2}]
  %5 = xla_tuple %s2, %s3, %s4
  %s6 = sld [smem:[#allocation0]]
  $region61: #{dblock_forward.4} parent=0
    _
  %s8 = ssub.s32 1, %s6
  %s9 = scalar_select 0, %s8, %s6
  loop: start=0, step=1, limit=6
  $region2: #{dblock_forward.4} parent=0 // loop_pre_header
    _
  $region3: #{dblock_forward.4} parent=0 // loop_header
    %s11 = sphi 0, %s15
    %p12 = scmp.ge.s32.totalorder %s11, 6
    %s18 = sphi 0, %s30
    %s19 = sphi 0, %s26
    %s20 = sphi 0, %s18
    %s21 = sphi 0, %s19
    %s22 = sphi 0, %s20
    %s23 = sphi 0, %s21
    %s37 = sphi 0, %s39
    %s40 = sphi 0, %s37
    %s41 = sphi 0, %s40
    %s57 = sphi 0, %s41
    %s61 = sphi 0, %s61
    %s63 = sphi 0, %s61
    %s64 = sphi 0, %s63
    %s78 = sphi 0, %s64
    %s88 = sphi 0, %s90
    %s91 = sphi 0, %s88
    %s92 = sphi 0, %s91
    %s108 = sphi 0, %s92
    %s114 = sphi 0, %s116
    %s117 = sphi 0, %s114
    %s118 = sphi 0, %s117
    %s134 = sphi 0, %s118
    %s140 = sphi 0, %s142
    %s143 = sphi 0, %s140
    %s144 = sphi 0, %s143
    %s160 = sphi 0, %s144
  $region4: #{dblock_forward.4} parent=0 // loop_header_branch
    %14 = sbr.rel (%p12) target = $region8
  $region5: #{dblock_forward.4} parent=0 // loop_body
    %s16 = ssub.s32 %s11, 1
    %s17 = ssub.s32 %s11, 2
    %s24 = sadd.s32 1, %s19
    %p25 = scmp.ge.s32.totalorder %s24, 2
    %s26 = scalar_select %p25, 0, %s24
    %s27 = sadd.s32 1, %s18
    %s28 = scalar_select %p25, %s27, %s18
    %p29 = scmp.ge.s32.totalorder %s28, 2
    %s30 = scalar_select %p29, 0, %s28
    %s31 = smul.u32 %s18, 2
    %s32 = sadd.s32 %s31, %s19
    %s33 = smul.u32 %s30, 2
    %s34 = sadd.s32 %s33, %s26
    %s35 = ssub.s32 %s32, %s34
    %p36 = scmp.eq.s32.totalorder %s35, 0
    %s38 = sadd.s32 %s37, 1
    %s39 = scalar_select %p36, %s37, %s38
    %p42 = pneg %p36
    %p43 = scmp.eq.s32.totalorder %s11, 3
    %p44 = por %p42, %p43
    %p45 = scmp.ne.s32.totalorder %s37, %s40
    %p46 = scmp.eq.s32.totalorder %s11, 0
    %p47 = por %p45, %p46
    %p48 = scmp.ne.s32.totalorder %s37, %s40
    %p49 = scmp.eq.s32.totalorder %s16, 3
    %p50 = por %p48, %p49
    %p51 = scmp.ne.s32.totalorder %s40, %s41
    %p52 = scmp.eq.s32.totalorder %s16, 0
    %p53 = por %p51, %p52
    %p54 = scmp.ne.s32.totalorder %s40, %s41
    %p55 = scmp.eq.s32.totalorder %s17, 3
    %p56 = por %p54, %p55
    %p58 = scmp.ne.s32.totalorder %s41, %s57
    %p59 = scmp.eq.s32.totalorder %s17, 0
    %p60 = por %p58, %p59
    %s62 = sadd.s32 %s61, 1
    %p65 = scmp.eq.s32.totalorder %s11, 3
    %p66 = scmp.ne.s32.totalorder %s61, %s63
    %p67 = scmp.eq.s32.totalorder %s11, 0
    %p68 = por %p66, %p67
    %p69 = scmp.ne.s32.totalorder %s61, %s63
    %p70 = scmp.eq.s32.totalorder %s16, 3
    %p71 = por %p69, %p70
    %p72 = scmp.ne.s32.totalorder %s63, %s64
    %p73 = scmp.eq.s32.totalorder %s16, 0
    %p74 = por %p72, %p73
    %p75 = scmp.ne.s32.totalorder %s63, %s64
    %p76 = scmp.eq.s32.totalorder %s17, 3
    %p77 = por %p75, %p76
    %p79 = scmp.ne.s32.totalorder %s64, %s78
    %p80 = scmp.eq.s32.totalorder %s17, 0
    %p81 = por %p79, %p80
    %s82 = smul.u32 %s18, 2
    %s83 = sadd.s32 %s82, %s19
    %s84 = smul.u32 %s30, 2
    %s85 = sadd.s32 %s84, %s26
    %s86 = ssub.s32 %s83, %s85
    %p87 = scmp.eq.s32.totalorder %s86, 0
    %s89 = sadd.s32 %s88, 1
    %s90 = scalar_select %p87, %s88, %s89
    %p93 = pneg %p87
    %p94 = scmp.eq.s32.totalorder %s11, 3
    %p95 = por %p93, %p94
    %p96 = scmp.ne.s32.totalorder %s88, %s91
    %p97 = scmp.eq.s32.totalorder %s11, 0
    %p98 = por %p96, %p97
    %p99 = scmp.ne.s32.totalorder %s88, %s91
    %p100 = scmp.eq.s32.totalorder %s16, 3
    %p101 = por %p99, %p100
    %p102 = scmp.ne.s32.totalorder %s91, %s92
    %p103 = scmp.eq.s32.totalorder %s16, 0
    %p104 = por %p102, %p103
    %p105 = scmp.ne.s32.totalorder %s91, %s92
    %p106 = scmp.eq.s32.totalorder %s17, 3
    %p107 = por %p105, %p106
    %p109 = scmp.ne.s32.totalorder %s92, %s108
    %p110 = scmp.eq.s32.totalorder %s17, 0
    %p111 = por %p109, %p110
    %s112 = ssub.s32 %s18, %s30
    %p113 = scmp.eq.s32.totalorder %s112, 0
    %s115 = sadd.s32 %s114, 1
    %s116 = scalar_select %p113, %s114, %s115
    %p119 = pneg %p113
    %p120 = scmp.eq.s32.totalorder %s11, 3
    %p121 = por %p119, %p120
    %p122 = scmp.ne.s32.totalorder %s114, %s117
    %p123 = scmp.eq.s32.totalorder %s11, 0
    %p124 = por %p122, %p123
    %p125 = scmp.ne.s32.totalorder %s114, %s117
    %p126 = scmp.eq.s32.totalorder %s16, 3
    %p127 = por %p125, %p126
    %p128 = scmp.ne.s32.totalorder %s117, %s118
    %p129 = scmp.eq.s32.totalorder %s16, 0
    %p130 = por %p128, %p129
    %p131 = scmp.ne.s32.totalorder %s117, %s118
    %p132 = scmp.eq.s32.totalorder %s17, 3
    %p133 = por %p131, %p132
    %p135 = scmp.ne.s32.totalorder %s118, %s134
    %p136 = scmp.eq.s32.totalorder %s17, 0
    %p137 = por %p135, %p136
    %s138 = ssub.s32 %s18, %s30
    %p139 = scmp.eq.s32.totalorder %s138, 0
    %s141 = sadd.s32 %s140, 1
    %s142 = scalar_select %p139, %s140, %s141
    %p145 = pneg %p139
    %p146 = scmp.eq.s32.totalorder %s11, 3
    %p147 = por %p145, %p146
    %p148 = scmp.ne.s32.totalorder %s140, %s143
    %p149 = scmp.eq.s32.totalorder %s11, 0
    %p150 = por %p148, %p149
    %p151 = scmp.ne.s32.totalorder %s140, %s143
    %p152 = scmp.eq.s32.totalorder %s16, 3
    %p153 = por %p151, %p152
    %p154 = scmp.ne.s32.totalorder %s143, %s144
    %p155 = scmp.eq.s32.totalorder %s16, 0
    %p156 = por %p154, %p155
    %p157 = scmp.ne.s32.totalorder %s143, %s144
    %p158 = scmp.eq.s32.totalorder %s17, 3
    %p159 = por %p157, %p158
    %p161 = scmp.ne.s32.totalorder %s144, %s160
    %p162 = scmp.eq.s32.totalorder %s17, 0
    %p163 = por %p161, %p162
    %p164 = scmp.le.s32.totalorder 1, %s11
    %p165 = scmp.lt.s32.totalorder %s11, 5
    %p166 = pnand %p164, %p165
    %p167 = pneg %p166
    // Predicated region
    $region9: #{dblock_forward.4} parent=5 // pred_check
      _
    $region10: #{dblock_forward.4} parent=5 // pred_check_branch
      %169 = sbr.rel (%p166) target = $region12
    $region11: #{dblock_forward.4} parent=5 // pred_region
      %s170 = ssub.s32 %s11, 1
      // Predicated region
      $region13: #{dblock_forward.4} parent=11 // pred_check
        %p171 = pneg %p74
      $region14: #{dblock_forward.4} parent=11 // pred_check_branch
        %173 = sbr.rel (%p171) target = $region16
      $region15: #{dblock_forward.4} parent=11 // pred_region
        _
      $region16: #{dblock_forward.4} parent=11 // pred_fallthru
        _
    $region12: #{dblock_forward.4} parent=5 // pred_fallthru
      _
    %p174 = scmp.lt.s32.totalorder %s11, 4
    // Predicated region
    $region17: #{dblock_forward.4} parent=5 // pred_check
      %p175 = pneg %p174
    $region18: #{dblock_forward.4} parent=5 // pred_check_branch
      %177 = sbr.rel (%p175) target = $region20
    $region19: #{dblock_forward.4} parent=5 // pred_region
      // Predicated region
      $region21: #{dblock_forward.4} parent=19 // pred_check
        %p178 = pneg %p47
      $region22: #{dblock_forward.4} parent=19 // pred_check_branch
        %180 = sbr.rel (%p178) target = $region24
      $region23: #{dblock_forward.4} parent=19 // pred_region
        %s181 = smul.u32 %s18, 2
        %s182 = sadd.s32 %s181, %s19
        %s183 = smul.u32 2, %s182
        %p184 = scmp.lt.s32.totalorder %s183, 7
        %s185 = scalar_select %p184, %s183, 7
        %s186 = smul.addr %s185, 5
        %s187 = smul.addr %s186, 4
        %s188 = scalar_lea.vmem %s0, %s187
        %s189 = smul.u32 %s18, 2
        %s190 = sadd.s32 %s189, %s19
        %s191 = smul.u32 2, %s190
      $region24: #{dblock_forward.4} parent=19 // pred_fallthru
        _
    $region20: #{dblock_forward.4} parent=5 // pred_fallthru
      _
    %p192 = scmp.le.s32.totalorder 1, %s11
    %p193 = scmp.lt.s32.totalorder %s11, 5
    %p194 = pnand %p192, %p193
    %p195 = pneg %p194
    // Predicated region
    $region25: #{dblock_forward.4} parent=5 // pred_check
      _
    $region26: #{dblock_forward.4} parent=5 // pred_check_branch
      %197 = sbr.rel (%p194) target = $region28
    $region27: #{dblock_forward.4} parent=5 // pred_region
      %s198 = ssub.s32 %s11, 1
      %s199 = smul.u32 %s20, 2
      %s200 = sadd.s32 %s199, %s21
      %s201 = smul.u32 2, %s200
      %p202 = scmp.lt.s32.totalorder %s201, 7
      %s203 = scalar_select %p202, %s201, 7
      %s204 = smul.addr %s203, 5
      %s205 = smul.addr %s204, 4
      %s206 = scalar_lea.vmem %s0, %s205
      %p207 = pneg %p53
      %p208 = pneg %p50
      %p209 = pneg %p74
      %p210 = pneg %p71
      %p211 = pneg %p104
      %p212 = pneg %p101
      %s213 = smul.u32 %s20, 2
      %s214 = sadd.s32 %s213, %s21
      %s215 = smul.u32 2, %s214
      %p216 = scmp.lt.s32.totalorder %s215, 7
      %s217 = scalar_select %p216, %s215, 7
      %s218 = smul.addr %s217, 4
      %s219 = scalar_lea.vmem %s2, %s218
      %p220 = pneg %p130
      %p221 = pneg %p127
      %p222 = scmp.lt.s32.totalorder %s20, 1
      %s223 = scalar_select %p222, %s20, 1
      %s224 = smul.addr %s223, 8
      %s225 = scalar_lea.vmem %s3, %s224
      %p226 = pneg %p156
      %p227 = pneg %p153
      %p228 = scmp.lt.s32.totalorder %s20, 1
      %s229 = scalar_select %p228, %s20, 1
      %s230 = smul.addr %s229, 8
      %s231 = scalar_lea.vmem %s4, %s230
      %s232 = smul.u32 %s20, 2
      %s233 = sadd.s32 %s232, %s21
      %s234 = smul.u32 2, %s233
      %p235 = scmp.lt.s32.totalorder %s234, 7
      %s236 = scalar_select %p235, %s234, 7
      %s237 = smul.addr %s236, 5
      %s238 = smul.addr %s237, 4
      %s239 = scalar_lea.vmem %s0, %s238
      %s240 = smul.u32 %s20, 2
      %s241 = sadd.s32 %s240, %s21
      %s242 = smul.u32 2, %s241
      %s243 = smul.u32 %s20, 2
      %s244 = sadd.s32 %s243, %s21
      %s245 = smul.u32 2, %s244
      %p246 = scmp.lt.s32.totalorder %s245, 7
      %s247 = scalar_select %p246, %s245, 7
      %s248 = smul.addr %s247, 4
      %s249 = scalar_lea.vmem %s2, %s248
      %s250 = smul.u32 %s20, 2
      %s251 = sadd.s32 %s250, %s21
      %s252 = smul.u32 2, %s251
      %p253 = scmp.lt.s32.totalorder %s20, 1
      %s254 = scalar_select %p253, %s20, 1
      %s255 = smul.addr %s254, 8
      %s256 = scalar_lea.vmem %s3, %s255
      %p257 = scmp.lt.s32.totalorder %s20, 1
      %s258 = scalar_select %p257, %s20, 1
      %s259 = smul.addr %s258, 8
      %s260 = scalar_lea.vmem %s4, %s259
      %p262 = scmp.eq.s32.totalorder %s21, 0
      // Predicated region
      $region29: #{dblock_forward.4} parent=27 // pred_check
        %p263 = pneg %p262
      $region30: #{dblock_forward.4} parent=27 // pred_check_branch
        %265 = sbr.rel (%p263) target = $region32
      $region31: #{dblock_forward.4} parent=27 // pred_region
        %266 = vst [vmem:[%s256] sm:$0xff] 0.0
        %267 = vst [vmem:[%s260] sm:$0xff] 0.0
      $region32: #{dblock_forward.4} parent=27 // pred_fallthru
        _
      %v268 = vld [vmem:[%s239] sm:$0xff]
      %v269 = vld [vmem:[%s239 + $0x8] sm:$0xff]
      %v270 = vld [vmem:[%s239 + $0x10] sm:$0xf]
      %v271 = vld [vmem:[%s239 + $0x14] sm:$0xff]
      %v272 = vld [vmem:[%s239 + $0x1c] sm:$0xff]
      %v273 = vld [vmem:[%s239 + $0x24] sm:$0xf]
      %v274 = vld [vmem:[%s1] sm:$0xf]
      %v275 = vld [vmem:[%s1 + $0x4] sm:$0xf]
      %v276 = vld [vmem:[%s1 + $0x8] sm:$0xf]
      %v277 = vld [vmem:[%s1 + $0xc] sm:$0xf]
      %v278 = vld [vmem:[%s1 + $0x10] sm:$0xf]
      %v279 = vld [vmem:[%s1 + $0x14] sm:$0xf]
      %v280 = vld [vmem:[%s1 + $0x18] sm:$0xf]
      %v281 = vld [vmem:[%s1 + $0x1c] sm:$0xf]
      %v282 = vld [vmem:[%s1 + $0x20] sm:$0xf]
      %v283 = vld [vmem:[%s1 + $0x24] sm:$0xf]
      %v284 = vld [vmem:[%s1 + $0x28] sm:$0xf]
      %v285 = vld [vmem:[%s1 + $0x2c] sm:$0xf]
      %v286 = vld [vmem:[%s1 + $0x30] sm:$0xf]
      %v287 = vld [vmem:[%s1 + $0x34] sm:$0xf]
      %v288 = vld [vmem:[%s1 + $0x38] sm:$0xf]
      %v289 = vld [vmem:[%s1 + $0x3c] sm:$0xf]
      %v290 = vld [vmem:[%s1 + $0x40] sm:$0xf]
      %v291 = vld [vmem:[%s1 + $0x44] sm:$0xf]
      %v292 = vld [vmem:[%s1 + $0x48] sm:$0xf]
      %v293 = vld [vmem:[%s1 + $0x4c] sm:$0xf]
      %v294 = vld [vmem:[%s1 + $0x50] sm:$0xf]
      %v295 = vld [vmem:[%s1 + $0x54] sm:$0xf]
      %v296 = vld [vmem:[%s1 + $0x58] sm:$0xf]
      %v297 = vld [vmem:[%s1 + $0x5c] sm:$0xf]
      %v298 = vld [vmem:[%s1 + $0x60] sm:$0xf]
      %v299 = vld [vmem:[%s1 + $0x64] sm:$0xf]
      %v300 = vld [vmem:[%s1 + $0x68] sm:$0xf]
      %v301 = vld [vmem:[%s1 + $0x6c] sm:$0xf]
      %v302 = vld [vmem:[%s1 + $0x70] sm:$0xf]
      %v303 = vld [vmem:[%s1 + $0x74] sm:$0xf]
      %v304 = vld [vmem:[%s1 + $0x78] sm:$0xf]
      %v305 = vld [vmem:[%s1 + $0x7c] sm:$0xf]
      %v306 = vld [vmem:[%s1 + $0x80] sm:$0xf]
      %v307 = vld [vmem:[%s1 + $0x84] sm:$0xf]
      %v308 = vld [vmem:[%s1 + $0x88] sm:$0xf]
      %v309 = vld [vmem:[%s1 + $0x8c] sm:$0xf]
      %v310 = vld [vmem:[%s1 + $0x90] sm:$0xf]
      %v311 = vld [vmem:[%s1 + $0x94] sm:$0xf]
      %v312 = vld [vmem:[%s1 + $0x98] sm:$0xf]
      %v313 = vld [vmem:[%s1 + $0x9c] sm:$0xf]
      %v314 = vld [vmem:[%s1 + $0xa0] sm:$0xf]
      %v315 = vld [vmem:[%s1 + $0xa4] sm:$0xf]
      %v316 = vld [vmem:[%s1 + $0xa8] sm:$0xf]
      %v317 = vld [vmem:[%s1 + $0xac] sm:$0xf]
      %v318 = vld [vmem:[%s1 + $0xb0] sm:$0xf]
      %v319 = vld [vmem:[%s1 + $0xb4] sm:$0xf]
      %v320 = vld [vmem:[%s1 + $0xb8] sm:$0xf]
      %v321 = vld [vmem:[%s1 + $0xbc] sm:$0xf]
      %v322 = vld [vmem:[%s1 + $0xc0] sm:$0xf]
      %v323 = vld [vmem:[%s1 + $0xc4] sm:$0xf]
      %v324 = vld [vmem:[%s1 + $0xc8] sm:$0xf]
      %v325 = vld [vmem:[%s1 + $0xcc] sm:$0xf]
      %v326 = vld [vmem:[%s1 + $0xd0] sm:$0xf]
      %v327 = vld [vmem:[%s1 + $0xd4] sm:$0xf]
      %v328 = vld [vmem:[%s1 + $0xd8] sm:$0xf]
      %v329 = vld [vmem:[%s1 + $0xdc] sm:$0xf]
      %v330 = vld [vmem:[%s1 + $0xe0] sm:$0xf]
      %v331 = vld [vmem:[%s1 + $0xe4] sm:$0xf]
      %v332 = vld [vmem:[%s1 + $0xe8] sm:$0xf]
      %v333 = vld [vmem:[%s1 + $0xec] sm:$0xf]
      %v334 = vld [vmem:[%s1 + $0xf0] sm:$0xf]
      %v335 = vld [vmem:[%s1 + $0xf4] sm:$0xf]
      %v336 = vld [vmem:[%s1 + $0xf8] sm:$0xf]
      %v337 = vld [vmem:[%s1 + $0xfc] sm:$0xf]
      %v338 = vld [vmem:[%s1 + $0x100] sm:$0xf]
      %v339 = vld [vmem:[%s1 + $0x104] sm:$0xf]
      %v340 = vld [vmem:[%s1 + $0x108] sm:$0xf]
      %v341 = vld [vmem:[%s1 + $0x10c] sm:$0xf]
      %v342 = vld [vmem:[%s1 + $0x110] sm:$0xf]
      %v343 = vld [vmem:[%s1 + $0x114] sm:$0xf]
      %v344 = vld [vmem:[%s1 + $0x118] sm:$0xf]
      %v345 = vld [vmem:[%s1 + $0x11c] sm:$0xf]
      %v352 = vunpack.c.l.b16 %v268
      %v353 = vunpack.c.h.b16 %v268
      %v354 = vunpack.c.l.b16 %v269
      %v355 = vunpack.c.h.b16 %v269
      %v356 = vunpack.c.l.b16 %v270
      %v357 = vunpack.c.l.b16 %v271
      %v358 = vunpack.c.h.b16 %v271
      %v359 = vunpack.c.l.b16 %v272
      %v360 = vunpack.c.h.b16 %v272
      %v361 = vunpack.c.l.b16 %v273
      %v362 = vpack.c.b16 %v357, %v352
      %v363 = vpack.c.b16 %v358, %v353
      %v364 = vpack.c.b16 %v359, %v354
      %v365 = vpack.c.b16 %v360, %v355
      %v366 = vpack.c.b16 %v361, %v356
      %v443 = vunpack.c.l.b16 %v274
      %v444 = vunpack.c.l.b16 %v275
      %v445 = vunpack.c.l.b16 %v276
      %v446 = vunpack.c.l.b16 %v277
      %v447 = vunpack.c.l.b16 %v278
      %v448 = vunpack.c.l.b16 %v279
      %v449 = vunpack.c.l.b16 %v280
      %v450 = vunpack.c.l.b16 %v281
      %v451 = vunpack.c.l.b16 %v282
      %v452 = vunpack.c.l.b16 %v283
      %v453 = vunpack.c.l.b16 %v284
      %v454 = vunpack.c.l.b16 %v285
      %v455 = vunpack.c.l.b16 %v286
      %v456 = vunpack.c.l.b16 %v287
      %v457 = vunpack.c.l.b16 %v288
      %v458 = vunpack.c.l.b16 %v289
      %v459 = vunpack.c.l.b16 %v290
      %v460 = vunpack.c.l.b16 %v291
      %v461 = vunpack.c.l.b16 %v292
      %v462 = vunpack.c.l.b16 %v293
      %v463 = vunpack.c.l.b16 %v294
      %v464 = vunpack.c.l.b16 %v295
      %v465 = vunpack.c.l.b16 %v296
      %v466 = vunpack.c.l.b16 %v297
      %v467 = vunpack.c.l.b16 %v298
      %v468 = vunpack.c.l.b16 %v299
      %v469 = vunpack.c.l.b16 %v300
      %v470 = vunpack.c.l.b16 %v301
      %v471 = vunpack.c.l.b16 %v302
      %v472 = vunpack.c.l.b16 %v303
      %v473 = vunpack.c.l.b16 %v304
      %v474 = vunpack.c.l.b16 %v305
      %v475 = vunpack.c.l.b16 %v306
      %v476 = vunpack.c.l.b16 %v307
      %v477 = vunpack.c.l.b16 %v308
      %v478 = vunpack.c.l.b16 %v309
      %v479 = vunpack.c.l.b16 %v310
      %v480 = vunpack.c.l.b16 %v311
      %v481 = vunpack.c.l.b16 %v312
      %v482 = vunpack.c.l.b16 %v313
      %v483 = vunpack.c.l.b16 %v314
      %v484 = vunpack.c.l.b16 %v315
      %v485 = vunpack.c.l.b16 %v316
      %v486 = vunpack.c.l.b16 %v317
      %v487 = vunpack.c.l.b16 %v318
      %v488 = vunpack.c.l.b16 %v319
      %v489 = vunpack.c.l.b16 %v320
      %v490 = vunpack.c.l.b16 %v321
      %v491 = vunpack.c.l.b16 %v322
      %v492 = vunpack.c.l.b16 %v323
      %v493 = vunpack.c.l.b16 %v324
      %v494 = vunpack.c.l.b16 %v325
      %v495 = vunpack.c.l.b16 %v326
      %v496 = vunpack.c.l.b16 %v327
      %v497 = vunpack.c.l.b16 %v328
      %v498 = vunpack.c.l.b16 %v329
      %v499 = vunpack.c.l.b16 %v330
      %v500 = vunpack.c.l.b16 %v331
      %v501 = vunpack.c.l.b16 %v332
      %v502 = vunpack.c.l.b16 %v333
      %v503 = vunpack.c.l.b16 %v334
      %v504 = vunpack.c.l.b16 %v335
      %v505 = vunpack.c.l.b16 %v336
      %v506 = vunpack.c.l.b16 %v337
      %v507 = vunpack.c.l.b16 %v338
      %v508 = vunpack.c.l.b16 %v339
      %v509 = vunpack.c.l.b16 %v340
      %v510 = vunpack.c.l.b16 %v341
      %v511 = vunpack.c.l.b16 %v342
      %v512 = vunpack.c.l.b16 %v343
      %v513 = vunpack.c.l.b16 %v344
      %v514 = vunpack.c.l.b16 %v345
      %v515 = vpack.c.b16 %v444, %v443
      %v516 = vpack.c.b16 %v446, %v445
      %v517 = vpack.c.b16 %v448, %v447
      %v518 = vpack.c.b16 %v450, %v449
      %v519 = vpack.c.b16 %v452, %v451
      %v520 = vpack.c.b16 %v454, %v453
      %v521 = vpack.c.b16 %v456, %v455
      %v522 = vpack.c.b16 %v458, %v457
      %v523 = vpack.c.b16 %v460, %v459
      %v524 = vpack.c.b16 %v462, %v461
      %v525 = vpack.c.b16 %v464, %v463
      %v526 = vpack.c.b16 %v466, %v465
      %v527 = vpack.c.b16 %v468, %v467
      %v528 = vpack.c.b16 %v470, %v469
      %v529 = vpack.c.b16 %v472, %v471
      %v530 = vpack.c.b16 %v474, %v473
      %v531 = vpack.c.b16 %v476, %v475
      %v532 = vpack.c.b16 %v478, %v477
      %v533 = vpack.c.b16 %v480, %v479
      %v534 = vpack.c.b16 %v482, %v481
      %v535 = vpack.c.b16 %v484, %v483
      %v536 = vpack.c.b16 %v486, %v485
      %v537 = vpack.c.b16 %v488, %v487
      %v538 = vpack.c.b16 %v490, %v489
      %v539 = vpack.c.b16 %v492, %v491
      %v540 = vpack.c.b16 %v494, %v493
      %v541 = vpack.c.b16 %v496, %v495
      %v542 = vpack.c.b16 %v498, %v497
      %v543 = vpack.c.b16 %v500, %v499
      %v544 = vpack.c.b16 %v502, %v501
      %v545 = vpack.c.b16 %v504, %v503
      %v546 = vpack.c.b16 %v506, %v505
      %v547 = vpack.c.b16 %v508, %v507
      %v548 = vpack.c.b16 %v510, %v509
      %v549 = vpack.c.b16 %v512, %v511
      %v550 = vpack.c.b16 %v514, %v513
      %vm587 = vcmask 523264
      %v589 = vsel %vm587, %v366, 0
      %591 = vmatprep.subr.bf16.mxu0 0
      %592 = vmatpush1.bf16.msra.mxu0 %v522
      %593 = vmatprep.subr.bf16.mxu0 0
      %594 = vmatpush1.bf16.msra.mxu0 %v521
      %595 = vmatprep.subr.bf16.mxu0 0
      %596 = vmatpush1.bf16.msra.mxu0 %v520
      %597 = vmatprep.subr.bf16.mxu0 0
      %598 = vmatpush1.bf16.msra.mxu0 %v519
      %599 = vmatprep.subr.bf16.mxu0 0
      %600 = vmatpush1.bf16.msra.mxu0 %v518
      %601 = vmatprep.subr.bf16.mxu0 0
      %602 = vmatpush1.bf16.msra.mxu0 %v517
      %603 = vmatprep.subr.bf16.mxu0 0
      %604 = vmatpush1.bf16.msra.mxu0 %v516
      %605 = vmatprep.subr.bf16.mxu0 0
      %606 = vmatpush1.bf16.msra.mxu0 %v515
      %607 = vmatprep.subr.bf16.mxu0 0
      %608 = vmatpush2.bf16.msra.mxu0 %v530
      %609 = vmatprep.subr.bf16.mxu0 0
      %610 = vmatpush2.bf16.msra.mxu0 %v529
      %611 = vmatprep.subr.bf16.mxu0 0
      %612 = vmatpush2.bf16.msra.mxu0 %v528
      %613 = vmatprep.subr.bf16.mxu0 0
      %614 = vmatpush2.bf16.msra.mxu0 %v527
      %615 = vmatprep.subr.bf16.mxu0 0
      %616 = vmatpush2.bf16.msra.mxu0 %v526
      %617 = vmatprep.subr.bf16.mxu0 0
      %618 = vmatpush2.bf16.msra.mxu0 %v525
      %619 = vmatprep.subr.bf16.mxu0 0
      %620 = vmatpush2.bf16.msra.mxu0 %v524
      %621 = vmatprep.subr.bf16.mxu0 0
      %622 = vmatpush2.bf16.msra.mxu0 %v523
      %623 = vmatprep.mubr.bf16.mxu0 %v363
      %624 = vmatmul.mubr.bf16.gmra.mxu0 %v362
      %v625 = vpop.f32.mrf.mxu0
      %v626 = vadd.f32 0.0, %v625
      %v627 = vpop.f32.mrf.mxu0
      %v628 = vpop.f32.mrf.mxu0
      %v629 = vadd.f32 0.0, %v628
      %v630 = vpop.f32.mrf.mxu0
      %631 = vdwg.mxu0
      %632 = vmatprep.subr.bf16.mxu0 0
      %633 = vmatpush1.bf16.msra.mxu0 %v538
      %634 = vmatprep.subr.bf16.mxu0 0
      %635 = vmatpush1.bf16.msra.mxu0 %v537
      %636 = vmatprep.subr.bf16.mxu0 0
      %637 = vmatpush1.bf16.msra.mxu0 %v536
      %638 = vmatprep.subr.bf16.mxu0 0
      %639 = vmatpush1.bf16.msra.mxu0 %v535
      %640 = vmatprep.subr.bf16.mxu0 0
      %641 = vmatpush1.bf16.msra.mxu0 %v534
      %642 = vmatprep.subr.bf16.mxu0 0
      %643 = vmatpush1.bf16.msra.mxu0 %v533
      %644 = vmatprep.subr.bf16.mxu0 0
      %645 = vmatpush1.bf16.msra.mxu0 %v532
      %646 = vmatprep.subr.bf16.mxu0 0
      %647 = vmatpush1.bf16.msra.mxu0 %v531
      %648 = vmatprep.subr.bf16.mxu0 0
      %649 = vmatpush2.bf16.msra.mxu0 %v546
      %650 = vmatprep.subr.bf16.mxu0 0
      %651 = vmatpush2.bf16.msra.mxu0 %v545
      %652 = vmatprep.subr.bf16.mxu0 0
      %653 = vmatpush2.bf16.msra.mxu0 %v544
      %654 = vmatprep.subr.bf16.mxu0 0
      %655 = vmatpush2.bf16.msra.mxu0 %v543
      %656 = vmatprep.subr.bf16.mxu0 0
      %657 = vmatpush2.bf16.msra.mxu0 %v542
      %658 = vmatprep.subr.bf16.mxu0 0
      %659 = vmatpush2.bf16.msra.mxu0 %v541
      %660 = vmatprep.subr.bf16.mxu0 0
      %661 = vmatpush2.bf16.msra.mxu0 %v540
      %662 = vmatprep.subr.bf16.mxu0 0
      %663 = vmatpush2.bf16.msra.mxu0 %v539
      %664 = vmatprep.mubr.bf16.mxu0 %v365
      %665 = vmatmul.mubr.bf16.gmra.mxu0 %v364
      %v666 = vpop.f32.mrf.mxu0
      %v667 = vadd.f32 %v626, %v666
      %v668 = vpop.f32.mrf.mxu0
      %v669 = vpop.f32.mrf.mxu0
      %v670 = vadd.f32 %v629, %v669
      %v671 = vpop.f32.mrf.mxu0
      %672 = vdwg.mxu0
      %673 = vmatprep.subr.bf16.mxu0 0
      %674 = vmatpush1.bf16.msra.mxu0 0
      %675 = vmatprep.subr.bf16.mxu0 0
      %676 = vmatpush1.bf16.msra.mxu0 0
      %677 = vmatprep.subr.bf16.mxu0 0
      %678 = vmatpush1.bf16.msra.mxu0 0
      %679 = vmatprep.subr.bf16.mxu0 0
      %680 = vmatpush1.bf16.msra.mxu0 0
      %681 = vmatprep.subr.bf16.mxu0 0
      %682 = vmatpush1.bf16.msra.mxu0 %v550
      %683 = vmatprep.subr.bf16.mxu0 0
      %684 = vmatpush1.bf16.msra.mxu0 %v549
      %685 = vmatprep.subr.bf16.mxu0 0
      %686 = vmatpush1.bf16.msra.mxu0 %v548
      %687 = vmatprep.subr.bf16.mxu0 0
      %688 = vmatpush1.bf16.msra.mxu0 %v547
      %689 = vmatprep.subr.bf16.mxu0 0
      %690 = vmatpush2.bf16.msra.mxu0 0
      %691 = vmatprep.subr.bf16.mxu0 0
      %692 = vmatpush2.bf16.msra.mxu0 0
      %693 = vmatprep.subr.bf16.mxu0 0
      %694 = vmatpush2.bf16.msra.mxu0 0
      %695 = vmatprep.subr.bf16.mxu0 0
      %696 = vmatpush2.bf16.msra.mxu0 0
      %697 = vmatprep.subr.bf16.mxu0 0
      %698 = vmatpush2.bf16.msra.mxu0 0
      %699 = vmatprep.subr.bf16.mxu0 0
      %700 = vmatpush2.bf16.msra.mxu0 0
      %701 = vmatprep.subr.bf16.mxu0 0
      %702 = vmatpush2.bf16.msra.mxu0 0
      %703 = vmatprep.subr.bf16.mxu0 0
      %704 = vmatpush2.bf16.msra.mxu0 0
      %705 = vmatprep.mubr.bf16.mxu0 0
      %706 = vmatmul.mubr.bf16.gmra.mxu0 %v589
      %v707 = vpop.f32.mrf.mxu0
      %v708 = vadd.f32 %v667, %v707
      %v709 = vpop.f32.mrf.mxu0
      %v710 = vpop.f32.mrf.mxu0
      %v711 = vadd.f32 %v670, %v710
      %v712 = vpop.f32.mrf.mxu0
      %713 = vdwg.mxu0
      %v714 = vpack.c.bf16 %v711, %v708
      %v716 = vunpack.c.l.b16 %v714
      %v717 = vunpack.c.h.b16 %v714
      %v718 = vpack.c.b16 %v716, %v716
      %v719 = vpack.c.b16 %v717, %v717
      %722 = vst [vmem:[%s249] sm:$0xf] %v718
      %723 = vst [vmem:[%s249 + $0x4] sm:$0xf] %v719
      %v724 = vld [vmem:[%s256] sm:$0xff]
      %v725 = vadd.f32 %v708, %v711
      %v726 = vadd.f32 %v724, %v725
      %727 = vst [vmem:[%s256] sm:$0xff] %v726
      %v728 = vld [vmem:[%s260] sm:$0xff]
      %v729 = vmul.f32 %v708, %v708
      %v730 = vmul.f32 %v711, %v711
      %v731 = vadd.f32 %v729, %v730
      %v732 = vadd.f32 %v728, %v731
      %733 = vst [vmem:[%s260] sm:$0xff] %v732
      %s734 = smul.u32 %s20, 2
      %s735 = sadd.s32 %s734, %s21
      %s736 = smul.u32 2, %s735
      %p737 = scmp.lt.s32.totalorder %s736, 7
      %s738 = scalar_select %p737, %s736, 7
      %s739 = smul.addr %s738, 4
      %s740 = scalar_lea.vmem %s2, %s739
      %p741 = scmp.lt.s32.totalorder %s20, 1
      %s742 = scalar_select %p741, %s20, 1
      %s743 = smul.addr %s742, 8
      %s744 = scalar_lea.vmem %s3, %s743
      %p745 = scmp.lt.s32.totalorder %s20, 1
      %s746 = scalar_select %p745, %s20, 1
      %s747 = smul.addr %s746, 8
      %s748 = scalar_lea.vmem %s4, %s747
      // Predicated region
      $region33: #{dblock_forward.4} parent=27 // pred_check
        %p749 = pneg %p101
      $region34: #{dblock_forward.4} parent=27 // pred_check_branch
        %751 = sbr.rel (%p749) target = $region36
      $region35: #{dblock_forward.4} parent=27 // pred_region
        %s752 = smul.u32 %s20, 2
        %s753 = sadd.s32 %s752, %s21
        %s754 = smul.u32 2, %s753
      $region36: #{dblock_forward.4} parent=27 // pred_fallthru
        _
      // Predicated region
      $region37: #{dblock_forward.4} parent=27 // pred_check
        %p755 = pneg %p127
      $region38: #{dblock_forward.4} parent=27 // pred_check_branch
        %757 = sbr.rel (%p755) target = $region40
      $region39: #{dblock_forward.4} parent=27 // pred_region
        _
      $region40: #{dblock_forward.4} parent=27 // pred_fallthru
        _
      // Predicated region
      $region41: #{dblock_forward.4} parent=27 // pred_check
        %p758 = pneg %p153
      $region42: #{dblock_forward.4} parent=27 // pred_check_branch
        %760 = sbr.rel (%p758) target = $region44
      $region43: #{dblock_forward.4} parent=27 // pred_region
        _
      $region44: #{dblock_forward.4} parent=27 // pred_fallthru
        _
    $region28: #{dblock_forward.4} parent=5 // pred_fallthru
      _
    %p761 = scmp.le.s32.totalorder 2, %s11
    // Predicated region
    $region45: #{dblock_forward.4} parent=5 // pred_check
      %p762 = pneg %p761
    $region46: #{dblock_forward.4} parent=5 // pred_check_branch
      %764 = sbr.rel (%p762) target = $region48
    $region47: #{dblock_forward.4} parent=5 // pred_region
      %s765 = ssub.s32 %s11, 2
      // Predicated region
      $region49: #{dblock_forward.4} parent=47 // pred_check
        %p766 = pneg %p107
      $region50: #{dblock_forward.4} parent=47 // pred_check_branch
        %768 = sbr.rel (%p766) target = $region52
      $region51: #{dblock_forward.4} parent=47 // pred_region
        %s769 = smul.u32 %s22, 2
        %s770 = sadd.s32 %s769, %s23
        %s771 = smul.u32 2, %s770
        %p772 = scmp.lt.s32.totalorder %s771, 7
        %s773 = scalar_select %p772, %s771, 7
        %s774 = smul.addr %s773, 4
        %s775 = scalar_lea.vmem %s2, %s774
      $region52: #{dblock_forward.4} parent=47 // pred_fallthru
        _
      // Predicated region
      $region53: #{dblock_forward.4} parent=47 // pred_check
        %p776 = pneg %p133
      $region54: #{dblock_forward.4} parent=47 // pred_check_branch
        %778 = sbr.rel (%p776) target = $region56
      $region55: #{dblock_forward.4} parent=47 // pred_region
        %p779 = scmp.lt.s32.totalorder %s22, 1
        %s780 = scalar_select %p779, %s22, 1
        %s781 = smul.addr %s780, 8
        %s782 = scalar_lea.vmem %s3, %s781
      $region56: #{dblock_forward.4} parent=47 // pred_fallthru
        _
      // Predicated region
      $region57: #{dblock_forward.4} parent=47 // pred_check
        %p783 = pneg %p159
      $region58: #{dblock_forward.4} parent=47 // pred_check_branch
        %785 = sbr.rel (%p783) target = $region60
      $region59: #{dblock_forward.4} parent=47 // pred_region
        %p786 = scmp.lt.s32.totalorder %s22, 1
        %s787 = scalar_select %p786, %s22, 1
        %s788 = smul.addr %s787, 8
        %s789 = scalar_lea.vmem %s4, %s788
      $region60: #{dblock_forward.4} parent=47 // pred_fallthru
        _
    $region48: #{dblock_forward.4} parent=5 // pred_fallthru
      _
  $region6: #{dblock_forward.4} parent=0 // loop_footer
    %s15 = sadd.s32 1, %s11
  $region7: #{dblock_forward.4} parent=0 // loop_footer_branch
    %10 = sbr.rel target = $region3
  $region8: #{dblock_forward.4} parent=0 // loop_exit
    _

// kernel: dblock_forward.5
$region0: #{dblock_forward.5}
  #allocation0 [shape = 'u32[]', space=smem, size = 0x4, offset = 0x4, fixed_abs, tag = 'smem constant byte address 0x4 - core index']
  #allocation1 [shape = 'u32[144,128]{1,0:T(1,128)}', space=vmem, size = 0x12000, scoped, tag = 'internal scratch']
  %s0 = inlined_call_operand.vmem [shape: bf16[64,128], index: 0, kind: input, shape index: {}]
  %s1 = inlined_call_operand.vmem [shape: f32[1,128], index: 1, kind: input, shape index: {}]
  %s2 = inlined_call_operand.vmem [shape: f32[1,128], index: 2, kind: input, shape index: {}]
  %s3 = inlined_call_operand.vmem [shape: bf16[64,128], index: 3, kind: output, shape index: {}]
  %s4 = sld [smem:[#allocation0]]
  $region22: #{dblock_forward.5} parent=0
    _
  %s6 = ssub.s32 1, %s4
  %s7 = scalar_select 0, %s6, %s4
  // Predicated region
  $region2: #{dblock_forward.5} parent=0 // pred_check
    _
  $region3: #{dblock_forward.5} parent=0 // pred_check_branch
    %9 = sbr.rel (0) target = $region5
  $region4: #{dblock_forward.5} parent=0 // pred_region
    _
  $region5: #{dblock_forward.5} parent=0 // pred_fallthru
    _
  // Predicated region
  $region6: #{dblock_forward.5} parent=0 // pred_check
    _
  $region7: #{dblock_forward.5} parent=0 // pred_check_branch
    %11 = sbr.rel (0) target = $region9
  $region8: #{dblock_forward.5} parent=0 // pred_region
    _
  $region9: #{dblock_forward.5} parent=0 // pred_fallthru
    _
  // Predicated region
  $region10: #{dblock_forward.5} parent=0 // pred_check
    _
  $region11: #{dblock_forward.5} parent=0 // pred_check_branch
    %13 = sbr.rel (0) target = $region13
  $region12: #{dblock_forward.5} parent=0 // pred_region
    _
  $region13: #{dblock_forward.5} parent=0 // pred_fallthru
    _
  %v14 = vld [vmem:[%s0] sm:$0xf]
  %v15 = vld [vmem:[%s0 + $0x4] sm:$0xf]
  %v16 = vld [vmem:[%s0 + $0x8] sm:$0xf]
  %v17 = vld [vmem:[%s0 + $0xc] sm:$0xf]
  %v18 = vld [vmem:[%s0 + $0x10] sm:$0xf]
  %v19 = vld [vmem:[%s0 + $0x14] sm:$0xf]
  %v20 = vld [vmem:[%s0 + $0x18] sm:$0xf]
  %v21 = vld [vmem:[%s0 + $0x1c] sm:$0xf]
  %v22 = vunpack.c.l.bf16 %v14
  %v23 = vunpack.c.l.bf16 %v15
  %v24 = vunpack.c.l.bf16 %v16
  %v25 = vunpack.c.l.bf16 %v17
  %v26 = vunpack.c.l.bf16 %v18
  %v27 = vunpack.c.l.bf16 %v19
  %v28 = vunpack.c.l.bf16 %v20
  %v29 = vunpack.c.l.bf16 %v21
  %v30 = vld [vmem:[%s1] sm:$0x1]
  %v32 = vlaneseq
  %v33 = vshrl.u32 %v32, 7
  %v34 = vsub.s32 0, %v33
  %v35 = vrot.slane %v30, %v34
  %v37 = vmul.f32 %v22, %v35
  %v38 = vmul.f32 %v23, %v35
  %v39 = vmul.f32 %v24, %v35
  %v40 = vmul.f32 %v25, %v35
  %v41 = vmul.f32 %v26, %v35
  %v42 = vmul.f32 %v27, %v35
  %v43 = vmul.f32 %v28, %v35
  %v44 = vmul.f32 %v29, %v35
  %v45 = vld [vmem:[%s2] sm:$0x1]
  %v47 = vlaneseq
  %v48 = vshrl.u32 %v47, 7
  %v49 = vsub.s32 0, %v48
  %v50 = vrot.slane %v45, %v49
  %v52 = vadd.f32 %v37, %v50
  %v53 = vadd.f32 %v38, %v50
  %v54 = vadd.f32 %v39, %v50
  %v55 = vadd.f32 %v40, %v50
  %v56 = vadd.f32 %v41, %v50
  %v57 = vadd.f32 %v42, %v50
  %v58 = vadd.f32 %v43, %v50
  %v59 = vadd.f32 %v44, %v50
  %vm60 = vcmp.gt.f32.partialorder %v52, 0.0
  %vm61 = vcmp.gt.f32.partialorder %v53, 0.0
  %vm62 = vcmp.gt.f32.partialorder %v54, 0.0
  %vm63 = vcmp.gt.f32.partialorder %v55, 0.0
  %vm64 = vcmp.gt.f32.partialorder %v56, 0.0
  %vm65 = vcmp.gt.f32.partialorder %v57, 0.0
  %vm66 = vcmp.gt.f32.partialorder %v58, 0.0
  %vm67 = vcmp.gt.f32.partialorder %v59, 0.0
  %v68 = vmul.f32 %v52, 0.2
  %v69 = vmul.f32 %v53, 0.2
  %v70 = vmul.f32 %v54, 0.2
  %v71 = vmul.f32 %v55, 0.2
  %v72 = vmul.f32 %v56, 0.2
  %v73 = vmul.f32 %v57, 0.2
  %v74 = vmul.f32 %v58, 0.2
  %v75 = vmul.f32 %v59, 0.2
  %v76 = vsel %vm60, %v52, %v68
  %v77 = vsel %vm61, %v53, %v69
  %v78 = vsel %vm62, %v54, %v70
  %v79 = vsel %vm63, %v55, %v71
  %v80 = vsel %vm64, %v56, %v72
  %v81 = vsel %vm65, %v57, %v73
  %v82 = vsel %vm66, %v58, %v74
  %v83 = vsel %vm67, %v59, %v75
  %v84 = vpack.c.bf16 %v77, %v76
  %v85 = vpack.c.bf16 %v79, %v78
  %v86 = vpack.c.bf16 %v81, %v80
  %v87 = vpack.c.bf16 %v83, %v82
  %v92 = vunpack.c.l.b16 %v84
  %v93 = vunpack.c.h.b16 %v84
  %v94 = vunpack.c.l.b16 %v85
  %v95 = vunpack.c.h.b16 %v85
  %v96 = vunpack.c.l.b16 %v86
  %v97 = vunpack.c.h.b16 %v86
  %v98 = vunpack.c.l.b16 %v87
  %v99 = vunpack.c.h.b16 %v87
  %v100 = vpack.c.b16 %v92, %v92
  %v101 = vpack.c.b16 %v93, %v93
  %v102 = vpack.c.b16 %v94, %v94
  %v103 = vpack.c.b16 %v95, %v95
  %v104 = vpack.c.b16 %v96, %v96
  %v105 = vpack.c.b16 %v97, %v97
  %v106 = vpack.c.b16 %v98, %v98
  %v107 = vpack.c.b16 %v99, %v99
  %116 = vst [vmem:[%s3] sm:$0xf] %v100
  %117 = vst [vmem:[%s3 + $0x4] sm:$0xf] %v101
  %118 = vst [vmem:[%s3 + $0x8] sm:$0xf] %v102
  %119 = vst [vmem:[%s3 + $0xc] sm:$0xf] %v103
  %120 = vst [vmem:[%s3 + $0x10] sm:$0xf] %v104
  %121 = vst [vmem:[%s3 + $0x14] sm:$0xf] %v105
  %122 = vst [vmem:[%s3 + $0x18] sm:$0xf] %v106
  %123 = vst [vmem:[%s3 + $0x1c] sm:$0xf] %v107
  // Predicated region
  $region14: #{dblock_forward.5} parent=0 // pred_check
    _
  $region15: #{dblock_forward.5} parent=0 // pred_check_branch
    %125 = sbr.rel (0) target = $region17
  $region16: #{dblock_forward.5} parent=0 // pred_region
    _
  $region17: #{dblock_forward.5} parent=0 // pred_fallthru
    _
  // Predicated region
  $region18: #{dblock_forward.5} parent=0 // pred_check
    _
  $region19: #{dblock_forward.5} parent=0 // pred_check_branch
    %127 = sbr.rel (0) target = $region21
  $region20: #{dblock_forward.5} parent=0 // pred_region
    _
  $region21: #{dblock_forward.5} parent=0 // pred_fallthru
    _

// kernel: mul.18
$region0: #{mul.18}
  %s0 = inlined_call_operand.vmem [shape: f32[3,3,8,8], index: 0, kind: input, shape index: {}]
  %s1 = inlined_call_operand.vmem [shape: f32[72,8], index: 1, kind: output, shape index: {}]
  $region1: #{mul.18} parent=0
    #allocation0 [shape = 'u8[98304]{0}', space=vmem, size = 0x18000, scoped, tag = 'scoped mem for input reshape']
    %s3 = sshll.u32 1, 4
    %s4 = ssub.s32 %s3, 1
    %s5 = smul.addr 4, 23
    %s6 = scalar_lea.vmem %s0, %s5
    %v7 = vld [vmem:[%s6] sm:%s4]
    %s8 = scalar_lea.vmem [#allocation0], 184
    %9 = vst [vmem:[%s8] sm:%s4] %v7
    %s10 = smul.addr 4, 22
    %s11 = scalar_lea.vmem %s0, %s10
    %v12 = vld [vmem:[%s11] sm:%s4]
    %s13 = scalar_lea.vmem [#allocation0], 176
    %14 = vst [vmem:[%s13] sm:%s4] %v12
    %s15 = smul.addr 4, 21
    %s16 = scalar_lea.vmem %s0, %s15
    %v17 = vld [vmem:[%s16] sm:%s4]
    %s18 = scalar_lea.vmem [#allocation0], 168
    %19 = vst [vmem:[%s18] sm:%s4] %v17
    %s20 = smul.addr 4, 20
    %s21 = scalar_lea.vmem %s0, %s20
    %v22 = vld [vmem:[%s21] sm:%s4]
    %s23 = scalar_lea.vmem [#allocation0], 160
    %24 = vst [vmem:[%s23] sm:%s4] %v22
    %s25 = smul.addr 4, 19
    %s26 = scalar_lea.vmem %s0, %s25
    %v27 = vld [vmem:[%s26] sm:%s4]
    %s28 = scalar_lea.vmem [#allocation0], 152
    %29 = vst [vmem:[%s28] sm:%s4] %v27
    %s30 = smul.addr 4, 18
    %s31 = scalar_lea.vmem %s0, %s30
    %v32 = vld [vmem:[%s31] sm:%s4]
    %s33 = scalar_lea.vmem [#allocation0], 144
    %34 = vst [vmem:[%s33] sm:%s4] %v32
    %s35 = smul.addr 4, 17
    %s36 = scalar_lea.vmem %s0, %s35
    %v37 = vld [vmem:[%s36] sm:%s4]
    %s38 = scalar_lea.vmem [#allocation0], 136
    %39 = vst [vmem:[%s38] sm:%s4] %v37
    %s40 = smul.addr 4, 16
    %s41 = scalar_lea.vmem %s0, %s40
    %v42 = vld [vmem:[%s41] sm:%s4]
    %s43 = scalar_lea.vmem [#allocation0], 128
    %44 = vst [vmem:[%s43] sm:%s4] %v42
    %s45 = smul.addr 4, 15
    %s46 = scalar_lea.vmem %s0, %s45
    %v47 = vld [vmem:[%s46] sm:%s4]
    %s48 = scalar_lea.vmem [#allocation0], 120
    %49 = vst [vmem:[%s48] sm:%s4] %v47
    %s50 = smul.addr 4, 14
    %s51 = scalar_lea.vmem %s0, %s50
    %v52 = vld [vmem:[%s51] sm:%s4]
    %s53 = scalar_lea.vmem [#allocation0], 112
    %54 = vst [vmem:[%s53] sm:%s4] %v52
    %s55 = smul.addr 4, 13
    %s56 = scalar_lea.vmem %s0, %s55
    %v57 = vld [vmem:[%s56] sm:%s4]
    %s58 = scalar_lea.vmem [#allocation0], 104
    %59 = vst [vmem:[%s58] sm:%s4] %v57
    %s60 = smul.addr 4, 12
    %s61 = scalar_lea.vmem %s0, %s60
    %v62 = vld [vmem:[%s61] sm:%s4]
    %s63 = scalar_lea.vmem [#allocation0], 96
    %64 = vst [vmem:[%s63] sm:%s4] %v62
    %s65 = smul.addr 4, 11
    %s66 = scalar_lea.vmem %s0, %s65
    %v67 = vld [vmem:[%s66] sm:%s4]
    %s68 = scalar_lea.vmem [#allocation0], 88
    %69 = vst [vmem:[%s68] sm:%s4] %v67
    %s70 = smul.addr 4, 10
    %s71 = scalar_lea.vmem %s0, %s70
    %v72 = vld [vmem:[%s71] sm:%s4]
    %s73 = scalar_lea.vmem [#allocation0], 80
    %74 = vst [vmem:[%s73] sm:%s4] %v72
    %s75 = smul.addr 4, 9
    %s76 = scalar_lea.vmem %s0, %s75
    %v77 = vld [vmem:[%s76] sm:%s4]
    %s78 = scalar_lea.vmem [#allocation0], 72
    %79 = vst [vmem:[%s78] sm:%s4] %v77
    %s80 = smul.addr 4, 8
    %s81 = scalar_lea.vmem %s0, %s80
    %v82 = vld [vmem:[%s81] sm:%s4]
    %s83 = scalar_lea.vmem [#allocation0], 64
    %84 = vst [vmem:[%s83] sm:%s4] %v82
    %s85 = smul.addr 4, 7
    %s86 = scalar_lea.vmem %s0, %s85
    %v87 = vld [vmem:[%s86] sm:%s4]
    %s88 = scalar_lea.vmem [#allocation0], 56
    %89 = vst [vmem:[%s88] sm:%s4] %v87
    %s90 = smul.addr 4, 6
    %s91 = scalar_lea.vmem %s0, %s90
    %v92 = vld [vmem:[%s91] sm:%s4]
    %s93 = scalar_lea.vmem [#allocation0], 48
    %94 = vst [vmem:[%s93] sm:%s4] %v92
    %s95 = smul.addr 4, 5
    %s96 = scalar_lea.vmem %s0, %s95
    %v97 = vld [vmem:[%s96] sm:%s4]
    %s98 = scalar_lea.vmem [#allocation0], 40
    %99 = vst [vmem:[%s98] sm:%s4] %v97
    %s100 = smul.addr 4, 4
    %s101 = scalar_lea.vmem %s0, %s100
    %v102 = vld [vmem:[%s101] sm:%s4]
    %s103 = scalar_lea.vmem [#allocation0], 32
    %104 = vst [vmem:[%s103] sm:%s4] %v102
    %s105 = smul.addr 4, 3
    %s106 = scalar_lea.vmem %s0, %s105
    %v107 = vld [vmem:[%s106] sm:%s4]
    %s108 = scalar_lea.vmem [#allocation0], 24
    %109 = vst [vmem:[%s108] sm:%s4] %v107
    %s110 = smul.addr 4, 2
    %s111 = scalar_lea.vmem %s0, %s110
    %v112 = vld [vmem:[%s111] sm:%s4]
    %s113 = scalar_lea.vmem [#allocation0], 16
    %114 = vst [vmem:[%s113] sm:%s4] %v112
    %s115 = scalar_lea.vmem %s0, 4
    %v116 = vld [vmem:[%s115] sm:%s4]
    %s117 = scalar_lea.vmem [#allocation0], 8
    %118 = vst [vmem:[%s117] sm:%s4] %v116
    %v119 = vld [vmem:[%s0] sm:%s4]
    %120 = vst [vmem:[#allocation0] sm:%s4] %v119
    %v121 = vld [vmem:[#allocation0] ss:$24 sm:$0xf]
    %v122 = vld [vmem:[#allocation0] ss:$24 sm:$0xf0]
    %vm123 = vcmask 1047556
    %v124 = vsel %vm123, %v122, %v121
    %vm125 = vcmask 64512
    %126 = vst.msk [vmem:[%s1] sm:$0xff] %vm125, %v124
    %s127 = scalar_lea.vmem [#allocation0], 18
    %v128 = vld [vmem:[%s127] ss:$24 sm:$0xf]
    %s129 = scalar_lea.vmem [#allocation0], 18
    %v130 = vld [vmem:[%s129] ss:$24 sm:$0xf0]
    %vm131 = vcmask 1047556
    %v132 = vsel %vm131, %v130, %v128
    %133 = vrot.lane.b32.xlu0 %v132, 64
    %v134 = vpop.permute.xlu0 %133
    %vm135 = vcmask 589312
    %136 = vst.msk [vmem:[%s1] sm:$0xff] %vm135, %v134
    %s137 = scalar_lea.vmem [#allocation0], 17
    %v138 = vld [vmem:[%s137] ss:$24 sm:$0xf]
    %s139 = scalar_lea.vmem [#allocation0], 17
    %v140 = vld [vmem:[%s139] ss:$24 sm:$0xf0]
    %vm141 = vcmask 1047556
    %v142 = vsel %vm141, %v140, %v138
    %143 = vrot.lane.b32.xlu0 %v142, 56
    %v144 = vpop.permute.xlu0 %143
    %vm145 = vcmask 523712
    %146 = vst.msk [vmem:[%s1] sm:$0xff] %vm145, %v144
    %s147 = scalar_lea.vmem [#allocation0], 16
    %v148 = vld [vmem:[%s147] ss:$24 sm:$0xf]
    %s149 = scalar_lea.vmem [#allocation0], 16
    %v150 = vld [vmem:[%s149] ss:$24 sm:$0xf0]
    %vm151 = vcmask 1047556
    %v152 = vsel %vm151, %v150, %v148
    %153 = vrot.lane.b32.xlu0 %v152, 48
    %v154 = vpop.permute.xlu0 %153
    %vm155 = vcmask 458112
    %156 = vst.msk [vmem:[%s1] sm:$0xff] %vm155, %v154
    %s157 = scalar_lea.vmem [#allocation0], 10
    %v158 = vld [vmem:[%s157] ss:$24 sm:$0xf]
    %s159 = scalar_lea.vmem [#allocation0], 10
    %v160 = vld [vmem:[%s159] ss:$24 sm:$0xf0]
    %vm161 = vcmask 1047556
    %v162 = vsel %vm161, %v160, %v158
    %163 = vrot.lane.b32.xlu0 %v162, 40
    %v164 = vpop.permute.xlu0 %163
    %vm165 = vcmask 392512
    %166 = vst.msk [vmem:[%s1] sm:$0xff] %vm165, %v164
    %s167 = scalar_lea.vmem [#allocation0], 9
    %v168 = vld [vmem:[%s167] ss:$24 sm:$0xf]
    %s169 = scalar_lea.vmem [#allocation0], 9
    %v170 = vld [vmem:[%s169] ss:$24 sm:$0xf0]
    %vm171 = vcmask 1047556
    %v172 = vsel %vm171, %v170, %v168
    %173 = vrot.lane.b32.xlu0 %v172, 32
    %v174 = vpop.permute.xlu0 %173
    %vm175 = vcmask 326912
    %176 = vst.msk [vmem:[%s1] sm:$0xff] %vm175, %v174
    %s177 = scalar_lea.vmem [#allocation0], 8
    %v178 = vld [vmem:[%s177] ss:$24 sm:$0xf]
    %s179 = scalar_lea.vmem [#allocation0], 8
    %v180 = vld [vmem:[%s179] ss:$24 sm:$0xf0]
    %vm181 = vcmask 1047556
    %v182 = vsel %vm181, %v180, %v178
    %183 = vrot.lane.b32.xlu0 %v182, 24
    %v184 = vpop.permute.xlu0 %183
    %vm185 = vcmask 261312
    %186 = vst.msk [vmem:[%s1] sm:$0xff] %vm185, %v184
    %s187 = scalar_lea.vmem [#allocation0], 2
    %v188 = vld [vmem:[%s187] ss:$24 sm:$0xf]
    %s189 = scalar_lea.vmem [#allocation0], 2
    %v190 = vld [vmem:[%s189] ss:$24 sm:$0xf0]
    %vm191 = vcmask 1047556
    %v192 = vsel %vm191, %v190, %v188
    %193 = vrot.lane.b32.xlu0 %v192, 16
    %v194 = vpop.permute.xlu0 %193
    %vm195 = vcmask 195712
    %196 = vst.msk [vmem:[%s1] sm:$0xff] %vm195, %v194
    %s197 = scalar_lea.vmem [#allocation0], 1
    %v198 = vld [vmem:[%s197] ss:$24 sm:$0xf]
    %s199 = scalar_lea.vmem [#allocation0], 1
    %v200 = vld [vmem:[%s199] ss:$24 sm:$0xf0]
    %vm201 = vcmask 1047556
    %v202 = vsel %vm201, %v200, %v198
    %203 = vrot.lane.b32.xlu0 %v202, 8
    %v204 = vpop.permute.xlu0 %203
    %vm205 = vcmask 130112
    %206 = vst.msk [vmem:[%s1] sm:$0xff] %vm205, %v204

// kernel: dblock_forward.6
$region0: #{dblock_forward.6}
  #allocation0 [shape = 'u32[]', space=smem, size = 0x4, offset = 0x4, fixed_abs, tag = 'smem constant byte address 0x4 - core index']
  #allocation1 [shape = 'u32[144,128]{1,0:T(1,128)}', space=vmem, size = 0x12000, scoped, tag = 'internal scratch']
  %s0 = inlined_call_operand.vmem [shape: bf16[64,1152], index: 0, kind: input, shape index: {}]
  %s1 = inlined_call_operand.vmem [shape: bf16[1152,128], index: 1, kind: input, shape index: {}]
  %s2 = inlined_call_operand.vmem [shape: bf16[64,128], index: 2, kind: output, shape index: {0}]
  %s3 = inlined_call_operand.vmem [shape: f32[16,128], index: 3, kind: output, shape index: {1}]
  %s4 = inlined_call_operand.vmem [shape: f32[16,128], index: 4, kind: output, shape index: {2}]
  %5 = xla_tuple %s2, %s3, %s4
  %s6 = sld [smem:[#allocation0]]
  $region61: #{dblock_forward.6} parent=0
    _
  %s8 = ssub.s32 1, %s6
  %s9 = scalar_select 0, %s8, %s6
  loop: start=0, step=1, limit=6
  $region2: #{dblock_forward.6} parent=0 // loop_pre_header
    _
  $region3: #{dblock_forward.6} parent=0 // loop_header
    %s11 = sphi 0, %s15
    %p12 = scmp.ge.s32.totalorder %s11, 6
    %s18 = sphi 0, %s30
    %s19 = sphi 0, %s26
    %s20 = sphi 0, %s18
    %s21 = sphi 0, %s19
    %s22 = sphi 0, %s20
    %s23 = sphi 0, %s21
    %s37 = sphi 0, %s39
    %s40 = sphi 0, %s37
    %s41 = sphi 0, %s40
    %s57 = sphi 0, %s41
    %s61 = sphi 0, %s61
    %s63 = sphi 0, %s61
    %s64 = sphi 0, %s63
    %s78 = sphi 0, %s64
    %s88 = sphi 0, %s90
    %s91 = sphi 0, %s88
    %s92 = sphi 0, %s91
    %s108 = sphi 0, %s92
    %s114 = sphi 0, %s116
    %s117 = sphi 0, %s114
    %s118 = sphi 0, %s117
    %s134 = sphi 0, %s118
    %s140 = sphi 0, %s142
    %s143 = sphi 0, %s140
    %s144 = sphi 0, %s143
    %s160 = sphi 0, %s144
  $region4: #{dblock_forward.6} parent=0 // loop_header_branch
    %14 = sbr.rel (%p12) target = $region8
  $region5: #{dblock_forward.6} parent=0 // loop_body
    %s16 = ssub.s32 %s11, 1
    %s17 = ssub.s32 %s11, 2
    %s24 = sadd.s32 1, %s19
    %p25 = scmp.ge.s32.totalorder %s24, 2
    %s26 = scalar_select %p25, 0, %s24
    %s27 = sadd.s32 1, %s18
    %s28 = scalar_select %p25, %s27, %s18
    %p29 = scmp.ge.s32.totalorder %s28, 2
    %s30 = scalar_select %p29, 0, %s28
    %s31 = smul.u32 %s18, 2
    %s32 = sadd.s32 %s31, %s19
    %s33 = smul.u32 %s30, 2
    %s34 = sadd.s32 %s33, %s26
    %s35 = ssub.s32 %s32, %s34
    %p36 = scmp.eq.s32.totalorder %s35, 0
    %s38 = sadd.s32 %s37, 1
    %s39 = scalar_select %p36, %s37, %s38
    %p42 = pneg %p36
    %p43 = scmp.eq.s32.totalorder %s11, 3
    %p44 = por %p42, %p43
    %p45 = scmp.ne.s32.totalorder %s37, %s40
    %p46 = scmp.eq.s32.totalorder %s11, 0
    %p47 = por %p45, %p46
    %p48 = scmp.ne.s32.totalorder %s37, %s40
    %p49 = scmp.eq.s32.totalorder %s16, 3
    %p50 = por %p48, %p49
    %p51 = scmp.ne.s32.totalorder %s40, %s41
    %p52 = scmp.eq.s32.totalorder %s16, 0
    %p53 = por %p51, %p52
    %p54 = scmp.ne.s32.totalorder %s40, %s41
    %p55 = scmp.eq.s32.totalorder %s17, 3
    %p56 = por %p54, %p55
    %p58 = scmp.ne.s32.totalorder %s41, %s57
    %p59 = scmp.eq.s32.totalorder %s17, 0
    %p60 = por %p58, %p59
    %s62 = sadd.s32 %s61, 1
    %p65 = scmp.eq.s32.totalorder %s11, 3
    %p66 = scmp.ne.s32.totalorder %s61, %s63
    %p67 = scmp.eq.s32.totalorder %s11, 0
    %p68 = por %p66, %p67
    %p69 = scmp.ne.s32.totalorder %s61, %s63
    %p70 = scmp.eq.s32.totalorder %s16, 3
    %p71 = por %p69, %p70
    %p72 = scmp.ne.s32.totalorder %s63, %s64
    %p73 = scmp.eq.s32.totalorder %s16, 0
    %p74 = por %p72, %p73
    %p75 = scmp.ne.s32.totalorder %s63, %s64
    %p76 = scmp.eq.s32.totalorder %s17, 3
    %p77 = por %p75, %p76
    %p79 = scmp.ne.s32.totalorder %s64, %s78
    %p80 = scmp.eq.s32.totalorder %s17, 0
    %p81 = por %p79, %p80
    %s82 = smul.u32 %s18, 2
    %s83 = sadd.s32 %s82, %s19
    %s84 = smul.u32 %s30, 2
    %s85 = sadd.s32 %s84, %s26
    %s86 = ssub.s32 %s83, %s85
    %p87 = scmp.eq.s32.totalorder %s86, 0
    %s89 = sadd.s32 %s88, 1
    %s90 = scalar_select %p87, %s88, %s89
    %p93 = pneg %p87
    %p94 = scmp.eq.s32.totalorder %s11, 3
    %p95 = por %p93, %p94
    %p96 = scmp.ne.s32.totalorder %s88, %s91
    %p97 = scmp.eq.s32.totalorder %s11, 0
    %p98 = por %p96, %p97
    %p99 = scmp.ne.s32.totalorder %s88, %s91
    %p100 = scmp.eq.s32.totalorder %s16, 3
    %p101 = por %p99, %p100
    %p102 = scmp.ne.s32.totalorder %s91, %s92
    %p103 = scmp.eq.s32.totalorder %s16, 0
    %p104 = por %p102, %p103
    %p105 = scmp.ne.s32.totalorder %s91, %s92
    %p106 = scmp.eq.s32.totalorder %s17, 3
    %p107 = por %p105, %p106
    %p109 = scmp.ne.s32.totalorder %s92, %s108
    %p110 = scmp.eq.s32.totalorder %s17, 0
    %p111 = por %p109, %p110
    %s112 = ssub.s32 %s18, %s30
    %p113 = scmp.eq.s32.totalorder %s112, 0
    %s115 = sadd.s32 %s114, 1
    %s116 = scalar_select %p113, %s114, %s115
    %p119 = pneg %p113
    %p120 = scmp.eq.s32.totalorder %s11, 3
    %p121 = por %p119, %p120
    %p122 = scmp.ne.s32.totalorder %s114, %s117
    %p123 = scmp.eq.s32.totalorder %s11, 0
    %p124 = por %p122, %p123
    %p125 = scmp.ne.s32.totalorder %s114, %s117
    %p126 = scmp.eq.s32.totalorder %s16, 3
    %p127 = por %p125, %p126
    %p128 = scmp.ne.s32.totalorder %s117, %s118
    %p129 = scmp.eq.s32.totalorder %s16, 0
    %p130 = por %p128, %p129
    %p131 = scmp.ne.s32.totalorder %s117, %s118
    %p132 = scmp.eq.s32.totalorder %s17, 3
    %p133 = por %p131, %p132
    %p135 = scmp.ne.s32.totalorder %s118, %s134
    %p136 = scmp.eq.s32.totalorder %s17, 0
    %p137 = por %p135, %p136
    %s138 = ssub.s32 %s18, %s30
    %p139 = scmp.eq.s32.totalorder %s138, 0
    %s141 = sadd.s32 %s140, 1
    %s142 = scalar_select %p139, %s140, %s141
    %p145 = pneg %p139
    %p146 = scmp.eq.s32.totalorder %s11, 3
    %p147 = por %p145, %p146
    %p148 = scmp.ne.s32.totalorder %s140, %s143
    %p149 = scmp.eq.s32.totalorder %s11, 0
    %p150 = por %p148, %p149
    %p151 = scmp.ne.s32.totalorder %s140, %s143
    %p152 = scmp.eq.s32.totalorder %s16, 3
    %p153 = por %p151, %p152
    %p154 = scmp.ne.s32.totalorder %s143, %s144
    %p155 = scmp.eq.s32.totalorder %s16, 0
    %p156 = por %p154, %p155
    %p157 = scmp.ne.s32.totalorder %s143, %s144
    %p158 = scmp.eq.s32.totalorder %s17, 3
    %p159 = por %p157, %p158
    %p161 = scmp.ne.s32.totalorder %s144, %s160
    %p162 = scmp.eq.s32.totalorder %s17, 0
    %p163 = por %p161, %p162
    %p164 = scmp.le.s32.totalorder 1, %s11
    %p165 = scmp.lt.s32.totalorder %s11, 5
    %p166 = pnand %p164, %p165
    %p167 = pneg %p166
    // Predicated region
    $region9: #{dblock_forward.6} parent=5 // pred_check
      _
    $region10: #{dblock_forward.6} parent=5 // pred_check_branch
      %169 = sbr.rel (%p166) target = $region12
    $region11: #{dblock_forward.6} parent=5 // pred_region
      %s170 = ssub.s32 %s11, 1
      // Predicated region
      $region13: #{dblock_forward.6} parent=11 // pred_check
        %p171 = pneg %p74
      $region14: #{dblock_forward.6} parent=11 // pred_check_branch
        %173 = sbr.rel (%p171) target = $region16
      $region15: #{dblock_forward.6} parent=11 // pred_region
        _
      $region16: #{dblock_forward.6} parent=11 // pred_fallthru
        _
    $region12: #{dblock_forward.6} parent=5 // pred_fallthru
      _
    %p174 = scmp.lt.s32.totalorder %s11, 4
    // Predicated region
    $region17: #{dblock_forward.6} parent=5 // pred_check
      %p175 = pneg %p174
    $region18: #{dblock_forward.6} parent=5 // pred_check_branch
      %177 = sbr.rel (%p175) target = $region20
    $region19: #{dblock_forward.6} parent=5 // pred_region
      // Predicated region
      $region21: #{dblock_forward.6} parent=19 // pred_check
        %p178 = pneg %p47
      $region22: #{dblock_forward.6} parent=19 // pred_check_branch
        %180 = sbr.rel (%p178) target = $region24
      $region23: #{dblock_forward.6} parent=19 // pred_region
        %s181 = smul.u32 %s18, 2
        %s182 = sadd.s32 %s181, %s19
        %s183 = smul.u32 2, %s182
        %p184 = scmp.lt.s32.totalorder %s183, 7
        %s185 = scalar_select %p184, %s183, 7
        %s186 = smul.addr %s185, 9
        %s187 = smul.addr %s186, 4
        %s188 = scalar_lea.vmem %s0, %s187
        %s189 = smul.u32 %s18, 2
        %s190 = sadd.s32 %s189, %s19
        %s191 = smul.u32 2, %s190
      $region24: #{dblock_forward.6} parent=19 // pred_fallthru
        _
    $region20: #{dblock_forward.6} parent=5 // pred_fallthru
      _
    %p192 = scmp.le.s32.totalorder 1, %s11
    %p193 = scmp.lt.s32.totalorder %s11, 5
    %p194 = pnand %p192, %p193
    %p195 = pneg %p194
    // Predicated region
    $region25: #{dblock_forward.6} parent=5 // pred_check
      _
    $region26: #{dblock_forward.6} parent=5 // pred_check_branch
      %197 = sbr.rel (%p194) target = $region28
    $region27: #{dblock_forward.6} parent=5 // pred_region
      %s198 = ssub.s32 %s11, 1
      %s199 = smul.u32 %s20, 2
      %s200 = sadd.s32 %s199, %s21
      %s201 = smul.u32 2, %s200
      %p202 = scmp.lt.s32.totalorder %s201, 7
      %s203 = scalar_select %p202, %s201, 7
      %s204 = smul.addr %s203, 9
      %s205 = smul.addr %s204, 4
      %s206 = scalar_lea.vmem %s0, %s205
      %p207 = pneg %p53
      %p208 = pneg %p50
      %p209 = pneg %p74
      %p210 = pneg %p71
      %p211 = pneg %p104
      %p212 = pneg %p101
      %s213 = smul.u32 %s20, 2
      %s214 = sadd.s32 %s213, %s21
      %s215 = smul.u32 2, %s214
      %p216 = scmp.lt.s32.totalorder %s215, 7
      %s217 = scalar_select %p216, %s215, 7
      %s218 = smul.addr %s217, 4
      %s219 = scalar_lea.vmem %s2, %s218
      %p220 = pneg %p130
      %p221 = pneg %p127
      %p222 = scmp.lt.s32.totalorder %s20, 1
      %s223 = scalar_select %p222, %s20, 1
      %s224 = smul.addr %s223, 8
      %s225 = scalar_lea.vmem %s3, %s224
      %p226 = pneg %p156
      %p227 = pneg %p153
      %p228 = scmp.lt.s32.totalorder %s20, 1
      %s229 = scalar_select %p228, %s20, 1
      %s230 = smul.addr %s229, 8
      %s231 = scalar_lea.vmem %s4, %s230
      %s232 = smul.u32 %s20, 2
      %s233 = sadd.s32 %s232, %s21
      %s234 = smul.u32 2, %s233
      %p235 = scmp.lt.s32.totalorder %s234, 7
      %s236 = scalar_select %p235, %s234, 7
      %s237 = smul.addr %s236, 9
      %s238 = smul.addr %s237, 4
      %s239 = scalar_lea.vmem %s0, %s238
      %s240 = smul.u32 %s20, 2
      %s241 = sadd.s32 %s240, %s21
      %s242 = smul.u32 2, %s241
      %s243 = smul.u32 %s20, 2
      %s244 = sadd.s32 %s243, %s21
      %s245 = smul.u32 2, %s244
      %p246 = scmp.lt.s32.totalorder %s245, 7
      %s247 = scalar_select %p246, %s245, 7
      %s248 = smul.addr %s247, 4
      %s249 = scalar_lea.vmem %s2, %s248
      %s250 = smul.u32 %s20, 2
      %s251 = sadd.s32 %s250, %s21
      %s252 = smul.u32 2, %s251
      %p253 = scmp.lt.s32.totalorder %s20, 1
      %s254 = scalar_select %p253, %s20, 1
      %s255 = smul.addr %s254, 8
      %s256 = scalar_lea.vmem %s3, %s255
      %p257 = scmp.lt.s32.totalorder %s20, 1
      %s258 = scalar_select %p257, %s20, 1
      %s259 = smul.addr %s258, 8
      %s260 = scalar_lea.vmem %s4, %s259
      %p262 = scmp.eq.s32.totalorder %s21, 0
      // Predicated region
      $region29: #{dblock_forward.6} parent=27 // pred_check
        %p263 = pneg %p262
      $region30: #{dblock_forward.6} parent=27 // pred_check_branch
        %265 = sbr.rel (%p263) target = $region32
      $region31: #{dblock_forward.6} parent=27 // pred_region
        %266 = vst [vmem:[%s256] sm:$0xff] 0.0
        %267 = vst [vmem:[%s260] sm:$0xff] 0.0
      $region32: #{dblock_forward.6} parent=27 // pred_fallthru
        _
      %v268 = vld [vmem:[%s239] sm:$0xff]
      %v269 = vld [vmem:[%s239 + $0x8] sm:$0xff]
      %v270 = vld [vmem:[%s239 + $0x10] sm:$0xff]
      %v271 = vld [vmem:[%s239 + $0x18] sm:$0xff]
      %v272 = vld [vmem:[%s239 + $0x20] sm:$0xf]
      %v273 = vld [vmem:[%s239 + $0x24] sm:$0xff]
      %v274 = vld [vmem:[%s239 + $0x2c] sm:$0xff]
      %v275 = vld [vmem:[%s239 + $0x34] sm:$0xff]
      %v276 = vld [vmem:[%s239 + $0x3c] sm:$0xff]
      %v277 = vld [vmem:[%s239 + $0x44] sm:$0xf]
      %v278 = vld [vmem:[%s1] sm:$0xf]
      %v279 = vld [vmem:[%s1 + $0x4] sm:$0xf]
      %v280 = vld [vmem:[%s1 + $0x8] sm:$0xf]
      %v281 = vld [vmem:[%s1 + $0xc] sm:$0xf]
      %v282 = vld [vmem:[%s1 + $0x10] sm:$0xf]
      %v283 = vld [vmem:[%s1 + $0x14] sm:$0xf]
      %v284 = vld [vmem:[%s1 + $0x18] sm:$0xf]
      %v285 = vld [vmem:[%s1 + $0x1c] sm:$0xf]
      %v286 = vld [vmem:[%s1 + $0x20] sm:$0xf]
      %v287 = vld [vmem:[%s1 + $0x24] sm:$0xf]
      %v288 = vld [vmem:[%s1 + $0x28] sm:$0xf]
      %v289 = vld [vmem:[%s1 + $0x2c] sm:$0xf]
      %v290 = vld [vmem:[%s1 + $0x30] sm:$0xf]
      %v291 = vld [vmem:[%s1 + $0x34] sm:$0xf]
      %v292 = vld [vmem:[%s1 + $0x38] sm:$0xf]
      %v293 = vld [vmem:[%s1 + $0x3c] sm:$0xf]
      %v294 = vld [vmem:[%s1 + $0x40] sm:$0xf]
      %v295 = vld [vmem:[%s1 + $0x44] sm:$0xf]
      %v296 = vld [vmem:[%s1 + $0x48] sm:$0xf]
      %v297 = vld [vmem:[%s1 + $0x4c] sm:$0xf]
      %v298 = vld [vmem:[%s1 + $0x50] sm:$0xf]
      %v299 = vld [vmem:[%s1 + $0x54] sm:$0xf]
      %v300 = vld [vmem:[%s1 + $0x58] sm:$0xf]
      %v301 = vld [vmem:[%s1 + $0x5c] sm:$0xf]
      %v302 = vld [vmem:[%s1 + $0x60] sm:$0xf]
      %v303 = vld [vmem:[%s1 + $0x64] sm:$0xf]
      %v304 = vld [vmem:[%s1 + $0x68] sm:$0xf]
      %v305 = vld [vmem:[%s1 + $0x6c] sm:$0xf]
      %v306 = vld [vmem:[%s1 + $0x70] sm:$0xf]
      %v307 = vld [vmem:[%s1 + $0x74] sm:$0xf]
      %v308 = vld [vmem:[%s1 + $0x78] sm:$0xf]
      %v309 = vld [vmem:[%s1 + $0x7c] sm:$0xf]
      %v310 = vld [vmem:[%s1 + $0x80] sm:$0xf]
      %v311 = vld [vmem:[%s1 + $0x84] sm:$0xf]
      %v312 = vld [vmem:[%s1 + $0x88] sm:$0xf]
      %v313 = vld [vmem:[%s1 + $0x8c] sm:$0xf]
      %v314 = vld [vmem:[%s1 + $0x90] sm:$0xf]
      %v315 = vld [vmem:[%s1 + $0x94] sm:$0xf]
      %v316 = vld [vmem:[%s1 + $0x98] sm:$0xf]
      %v317 = vld [vmem:[%s1 + $0x9c] sm:$0xf]
      %v318 = vld [vmem:[%s1 + $0xa0] sm:$0xf]
      %v319 = vld [vmem:[%s1 + $0xa4] sm:$0xf]
      %v320 = vld [vmem:[%s1 + $0xa8] sm:$0xf]
      %v321 = vld [vmem:[%s1 + $0xac] sm:$0xf]
      %v322 = vld [vmem:[%s1 + $0xb0] sm:$0xf]
      %v323 = vld [vmem:[%s1 + $0xb4] sm:$0xf]
      %v324 = vld [vmem:[%s1 + $0xb8] sm:$0xf]
      %v325 = vld [vmem:[%s1 + $0xbc] sm:$0xf]
      %v326 = vld [vmem:[%s1 + $0xc0] sm:$0xf]
      %v327 = vld [vmem:[%s1 + $0xc4] sm:$0xf]
      %v328 = vld [vmem:[%s1 + $0xc8] sm:$0xf]
      %v329 = vld [vmem:[%s1 + $0xcc] sm:$0xf]
      %v330 = vld [vmem:[%s1 + $0xd0] sm:$0xf]
      %v331 = vld [vmem:[%s1 + $0xd4] sm:$0xf]
      %v332 = vld [vmem:[%s1 + $0xd8] sm:$0xf]
      %v333 = vld [vmem:[%s1 + $0xdc] sm:$0xf]
      %v334 = vld [vmem:[%s1 + $0xe0] sm:$0xf]
      %v335 = vld [vmem:[%s1 + $0xe4] sm:$0xf]
      %v336 = vld [vmem:[%s1 + $0xe8] sm:$0xf]
      %v337 = vld [vmem:[%s1 + $0xec] sm:$0xf]
      %v338 = vld [vmem:[%s1 + $0xf0] sm:$0xf]
      %v339 = vld [vmem:[%s1 + $0xf4] sm:$0xf]
      %v340 = vld [vmem:[%s1 + $0xf8] sm:$0xf]
      %v341 = vld [vmem:[%s1 + $0xfc] sm:$0xf]
      %v342 = vld [vmem:[%s1 + $0x100] sm:$0xf]
      %v343 = vld [vmem:[%s1 + $0x104] sm:$0xf]
      %v344 = vld [vmem:[%s1 + $0x108] sm:$0xf]
      %v345 = vld [vmem:[%s1 + $0x10c] sm:$0xf]
      %v346 = vld [vmem:[%s1 + $0x110] sm:$0xf]
      %v347 = vld [vmem:[%s1 + $0x114] sm:$0xf]
      %v348 = vld [vmem:[%s1 + $0x118] sm:$0xf]
      %v349 = vld [vmem:[%s1 + $0x11c] sm:$0xf]
      %v350 = vld [vmem:[%s1 + $0x120] sm:$0xf]
      %v351 = vld [vmem:[%s1 + $0x124] sm:$0xf]
      %v352 = vld [vmem:[%s1 + $0x128] sm:$0xf]
      %v353 = vld [vmem:[%s1 + $0x12c] sm:$0xf]
      %v354 = vld [vmem:[%s1 + $0x130] sm:$0xf]
      %v355 = vld [vmem:[%s1 + $0x134] sm:$0xf]
      %v356 = vld [vmem:[%s1 + $0x138] sm:$0xf]
      %v357 = vld [vmem:[%s1 + $0x13c] sm:$0xf]
      %v358 = vld [vmem:[%s1 + $0x140] sm:$0xf]
      %v359 = vld [vmem:[%s1 + $0x144] sm:$0xf]
      %v360 = vld [vmem:[%s1 + $0x148] sm:$0xf]
      %v361 = vld [vmem:[%s1 + $0x14c] sm:$0xf]
      %v362 = vld [vmem:[%s1 + $0x150] sm:$0xf]
      %v363 = vld [vmem:[%s1 + $0x154] sm:$0xf]
      %v364 = vld [vmem:[%s1 + $0x158] sm:$0xf]
      %v365 = vld [vmem:[%s1 + $0x15c] sm:$0xf]
      %v366 = vld [vmem:[%s1 + $0x160] sm:$0xf]
      %v367 = vld [vmem:[%s1 + $0x164] sm:$0xf]
      %v368 = vld [vmem:[%s1 + $0x168] sm:$0xf]
      %v369 = vld [vmem:[%s1 + $0x16c] sm:$0xf]
      %v370 = vld [vmem:[%s1 + $0x170] sm:$0xf]
      %v371 = vld [vmem:[%s1 + $0x174] sm:$0xf]
      %v372 = vld [vmem:[%s1 + $0x178] sm:$0xf]
      %v373 = vld [vmem:[%s1 + $0x17c] sm:$0xf]
      %v374 = vld [vmem:[%s1 + $0x180] sm:$0xf]
      %v375 = vld [vmem:[%s1 + $0x184] sm:$0xf]
      %v376 = vld [vmem:[%s1 + $0x188] sm:$0xf]
      %v377 = vld [vmem:[%s1 + $0x18c] sm:$0xf]
      %v378 = vld [vmem:[%s1 + $0x190] sm:$0xf]
      %v379 = vld [vmem:[%s1 + $0x194] sm:$0xf]
      %v380 = vld [vmem:[%s1 + $0x198] sm:$0xf]
      %v381 = vld [vmem:[%s1 + $0x19c] sm:$0xf]
      %v382 = vld [vmem:[%s1 + $0x1a0] sm:$0xf]
      %v383 = vld [vmem:[%s1 + $0x1a4] sm:$0xf]
      %v384 = vld [vmem:[%s1 + $0x1a8] sm:$0xf]
      %v385 = vld [vmem:[%s1 + $0x1ac] sm:$0xf]
      %v386 = vld [vmem:[%s1 + $0x1b0] sm:$0xf]
      %v387 = vld [vmem:[%s1 + $0x1b4] sm:$0xf]
      %v388 = vld [vmem:[%s1 + $0x1b8] sm:$0xf]
      %v389 = vld [vmem:[%s1 + $0x1bc] sm:$0xf]
      %v390 = vld [vmem:[%s1 + $0x1c0] sm:$0xf]
      %v391 = vld [vmem:[%s1 + $0x1c4] sm:$0xf]
      %v392 = vld [vmem:[%s1 + $0x1c8] sm:$0xf]
      %v393 = vld [vmem:[%s1 + $0x1cc] sm:$0xf]
      %v394 = vld [vmem:[%s1 + $0x1d0] sm:$0xf]
      %v395 = vld [vmem:[%s1 + $0x1d4] sm:$0xf]
      %v396 = vld [vmem:[%s1 + $0x1d8] sm:$0xf]
      %v397 = vld [vmem:[%s1 + $0x1dc] sm:$0xf]
      %v398 = vld [vmem:[%s1 + $0x1e0] sm:$0xf]
      %v399 = vld [vmem:[%s1 + $0x1e4] sm:$0xf]
      %v400 = vld [vmem:[%s1 + $0x1e8] sm:$0xf]
      %v401 = vld [vmem:[%s1 + $0x1ec] sm:$0xf]
      %v402 = vld [vmem:[%s1 + $0x1f0] sm:$0xf]
      %v403 = vld [vmem:[%s1 + $0x1f4] sm:$0xf]
      %v404 = vld [vmem:[%s1 + $0x1f8] sm:$0xf]
      %v405 = vld [vmem:[%s1 + $0x1fc] sm:$0xf]
      %v406 = vld [vmem:[%s1 + $0x200] sm:$0xf]
      %v407 = vld [vmem:[%s1 + $0x204] sm:$0xf]
      %v408 = vld [vmem:[%s1 + $0x208] sm:$0xf]
      %v409 = vld [vmem:[%s1 + $0x20c] sm:$0xf]
      %v410 = vld [vmem:[%s1 + $0x210] sm:$0xf]
      %v411 = vld [vmem:[%s1 + $0x214] sm:$0xf]
      %v412 = vld [vmem:[%s1 + $0x218] sm:$0xf]
      %v413 = vld [vmem:[%s1 + $0x21c] sm:$0xf]
      %v414 = vld [vmem:[%s1 + $0x220] sm:$0xf]
      %v415 = vld [vmem:[%s1 + $0x224] sm:$0xf]
      %v416 = vld [vmem:[%s1 + $0x228] sm:$0xf]
      %v417 = vld [vmem:[%s1 + $0x22c] sm:$0xf]
      %v418 = vld [vmem:[%s1 + $0x230] sm:$0xf]
      %v419 = vld [vmem:[%s1 + $0x234] sm:$0xf]
      %v420 = vld [vmem:[%s1 + $0x238] sm:$0xf]
      %v421 = vld [vmem:[%s1 + $0x23c] sm:$0xf]
      %v432 = vunpack.c.l.b16 %v268
      %v433 = vunpack.c.h.b16 %v268
      %v434 = vunpack.c.l.b16 %v269
      %v435 = vunpack.c.h.b16 %v269
      %v436 = vunpack.c.l.b16 %v270
      %v437 = vunpack.c.h.b16 %v270
      %v438 = vunpack.c.l.b16 %v271
      %v439 = vunpack.c.h.b16 %v271
      %v440 = vunpack.c.l.b16 %v272
      %v441 = vunpack.c.l.b16 %v273
      %v442 = vunpack.c.h.b16 %v273
      %v443 = vunpack.c.l.b16 %v274
      %v444 = vunpack.c.h.b16 %v274
      %v445 = vunpack.c.l.b16 %v275
      %v446 = vunpack.c.h.b16 %v275
      %v447 = vunpack.c.l.b16 %v276
      %v448 = vunpack.c.h.b16 %v276
      %v449 = vunpack.c.l.b16 %v277
      %v450 = vpack.c.b16 %v441, %v432
      %v451 = vpack.c.b16 %v442, %v433
      %v452 = vpack.c.b16 %v443, %v434
      %v453 = vpack.c.b16 %v444, %v435
      %v454 = vpack.c.b16 %v445, %v436
      %v455 = vpack.c.b16 %v446, %v437
      %v456 = vpack.c.b16 %v447, %v438
      %v457 = vpack.c.b16 %v448, %v439
      %v458 = vpack.c.b16 %v449, %v440
      %v612 = vunpack.c.l.b16 %v278
      %v613 = vunpack.c.l.b16 %v279
      %v614 = vunpack.c.l.b16 %v280
      %v615 = vunpack.c.l.b16 %v281
      %v616 = vunpack.c.l.b16 %v282
      %v617 = vunpack.c.l.b16 %v283
      %v618 = vunpack.c.l.b16 %v284
      %v619 = vunpack.c.l.b16 %v285
      %v620 = vunpack.c.l.b16 %v286
      %v621 = vunpack.c.l.b16 %v287
      %v622 = vunpack.c.l.b16 %v288
      %v623 = vunpack.c.l.b16 %v289
      %v624 = vunpack.c.l.b16 %v290
      %v625 = vunpack.c.l.b16 %v291
      %v626 = vunpack.c.l.b16 %v292
      %v627 = vunpack.c.l.b16 %v293
      %v628 = vunpack.c.l.b16 %v294
      %v629 = vunpack.c.l.b16 %v295
      %v630 = vunpack.c.l.b16 %v296
      %v631 = vunpack.c.l.b16 %v297
      %v632 = vunpack.c.l.b16 %v298
      %v633 = vunpack.c.l.b16 %v299
      %v634 = vunpack.c.l.b16 %v300
      %v635 = vunpack.c.l.b16 %v301
      %v636 = vunpack.c.l.b16 %v302
      %v637 = vunpack.c.l.b16 %v303
      %v638 = vunpack.c.l.b16 %v304
      %v639 = vunpack.c.l.b16 %v305
      %v640 = vunpack.c.l.b16 %v306
      %v641 = vunpack.c.l.b16 %v307
      %v642 = vunpack.c.l.b16 %v308
      %v643 = vunpack.c.l.b16 %v309
      %v644 = vunpack.c.l.b16 %v310
      %v645 = vunpack.c.l.b16 %v311
      %v646 = vunpack.c.l.b16 %v312
      %v647 = vunpack.c.l.b16 %v313
      %v648 = vunpack.c.l.b16 %v314
      %v649 = vunpack.c.l.b16 %v315
      %v650 = vunpack.c.l.b16 %v316
      %v651 = vunpack.c.l.b16 %v317
      %v652 = vunpack.c.l.b16 %v318
      %v653 = vunpack.c.l.b16 %v319
      %v654 = vunpack.c.l.b16 %v320
      %v655 = vunpack.c.l.b16 %v321
      %v656 = vunpack.c.l.b16 %v322
      %v657 = vunpack.c.l.b16 %v323
      %v658 = vunpack.c.l.b16 %v324
      %v659 = vunpack.c.l.b16 %v325
      %v660 = vunpack.c.l.b16 %v326
      %v661 = vunpack.c.l.b16 %v327
      %v662 = vunpack.c.l.b16 %v328
      %v663 = vunpack.c.l.b16 %v329
      %v664 = vunpack.c.l.b16 %v330
      %v665 = vunpack.c.l.b16 %v331
      %v666 = vunpack.c.l.b16 %v332
      %v667 = vunpack.c.l.b16 %v333
      %v668 = vunpack.c.l.b16 %v334
      %v669 = vunpack.c.l.b16 %v335
      %v670 = vunpack.c.l.b16 %v336
      %v671 = vunpack.c.l.b16 %v337
      %v672 = vunpack.c.l.b16 %v338
      %v673 = vunpack.c.l.b16 %v339
      %v674 = vunpack.c.l.b16 %v340
      %v675 = vunpack.c.l.b16 %v341
      %v676 = vunpack.c.l.b16 %v342
      %v677 = vunpack.c.l.b16 %v343
      %v678 = vunpack.c.l.b16 %v344
      %v679 = vunpack.c.l.b16 %v345
      %v680 = vunpack.c.l.b16 %v346
      %v681 = vunpack.c.l.b16 %v347
      %v682 = vunpack.c.l.b16 %v348
      %v683 = vunpack.c.l.b16 %v349
      %v684 = vunpack.c.l.b16 %v350
      %v685 = vunpack.c.l.b16 %v351
      %v686 = vunpack.c.l.b16 %v352
      %v687 = vunpack.c.l.b16 %v353
      %v688 = vunpack.c.l.b16 %v354
      %v689 = vunpack.c.l.b16 %v355
      %v690 = vunpack.c.l.b16 %v356
      %v691 = vunpack.c.l.b16 %v357
      %v692 = vunpack.c.l.b16 %v358
      %v693 = vunpack.c.l.b16 %v359
      %v694 = vunpack.c.l.b16 %v360
      %v695 = vunpack.c.l.b16 %v361
      %v696 = vunpack.c.l.b16 %v362
      %v697 = vunpack.c.l.b16 %v363
      %v698 = vunpack.c.l.b16 %v364
      %v699 = vunpack.c.l.b16 %v365
      %v700 = vunpack.c.l.b16 %v366
      %v701 = vunpack.c.l.b16 %v367
      %v702 = vunpack.c.l.b16 %v368
      %v703 = vunpack.c.l.b16 %v369
      %v704 = vunpack.c.l.b16 %v370
      %v705 = vunpack.c.l.b16 %v371
      %v706 = vunpack.c.l.b16 %v372
      %v707 = vunpack.c.l.b16 %v373
      %v708 = vunpack.c.l.b16 %v374
      %v709 = vunpack.c.l.b16 %v375
      %v710 = vunpack.c.l.b16 %v376
      %v711 = vunpack.c.l.b16 %v377
      %v712 = vunpack.c.l.b16 %v378
      %v713 = vunpack.c.l.b16 %v379
      %v714 = vunpack.c.l.b16 %v380
      %v715 = vunpack.c.l.b16 %v381
      %v716 = vunpack.c.l.b16 %v382
      %v717 = vunpack.c.l.b16 %v383
      %v718 = vunpack.c.l.b16 %v384
      %v719 = vunpack.c.l.b16 %v385
      %v720 = vunpack.c.l.b16 %v386
      %v721 = vunpack.c.l.b16 %v387
      %v722 = vunpack.c.l.b16 %v388
      %v723 = vunpack.c.l.b16 %v389
      %v724 = vunpack.c.l.b16 %v390
      %v725 = vunpack.c.l.b16 %v391
      %v726 = vunpack.c.l.b16 %v392
      %v727 = vunpack.c.l.b16 %v393
      %v728 = vunpack.c.l.b16 %v394
      %v729 = vunpack.c.l.b16 %v395
      %v730 = vunpack.c.l.b16 %v396
      %v731 = vunpack.c.l.b16 %v397
      %v732 = vunpack.c.l.b16 %v398
      %v733 = vunpack.c.l.b16 %v399
      %v734 = vunpack.c.l.b16 %v400
      %v735 = vunpack.c.l.b16 %v401
      %v736 = vunpack.c.l.b16 %v402
      %v737 = vunpack.c.l.b16 %v403
      %v738 = vunpack.c.l.b16 %v404
      %v739 = vunpack.c.l.b16 %v405
      %v740 = vunpack.c.l.b16 %v406
      %v741 = vunpack.c.l.b16 %v407
      %v742 = vunpack.c.l.b16 %v408
      %v743 = vunpack.c.l.b16 %v409
      %v744 = vunpack.c.l.b16 %v410
      %v745 = vunpack.c.l.b16 %v411
      %v746 = vunpack.c.l.b16 %v412
      %v747 = vunpack.c.l.b16 %v413
      %v748 = vunpack.c.l.b16 %v414
      %v749 = vunpack.c.l.b16 %v415
      %v750 = vunpack.c.l.b16 %v416
      %v751 = vunpack.c.l.b16 %v417
      %v752 = vunpack.c.l.b16 %v418
      %v753 = vunpack.c.l.b16 %v419
      %v754 = vunpack.c.l.b16 %v420
      %v755 = vunpack.c.l.b16 %v421
      %v756 = vpack.c.b16 %v613, %v612
      %v757 = vpack.c.b16 %v615, %v614
      %v758 = vpack.c.b16 %v617, %v616
      %v759 = vpack.c.b16 %v619, %v618
      %v760 = vpack.c.b16 %v621, %v620
      %v761 = vpack.c.b16 %v623, %v622
      %v762 = vpack.c.b16 %v625, %v624
      %v763 = vpack.c.b16 %v627, %v626
      %v764 = vpack.c.b16 %v629, %v628
      %v765 = vpack.c.b16 %v631, %v630
      %v766 = vpack.c.b16 %v633, %v632
      %v767 = vpack.c.b16 %v635, %v634
      %v768 = vpack.c.b16 %v637, %v636
      %v769 = vpack.c.b16 %v639, %v638
      %v770 = vpack.c.b16 %v641, %v640
      %v771 = vpack.c.b16 %v643, %v642
      %v772 = vpack.c.b16 %v645, %v644
      %v773 = vpack.c.b16 %v647, %v646
      %v774 = vpack.c.b16 %v649, %v648
      %v775 = vpack.c.b16 %v651, %v650
      %v776 = vpack.c.b16 %v653, %v652
      %v777 = vpack.c.b16 %v655, %v654
      %v778 = vpack.c.b16 %v657, %v656
      %v779 = vpack.c.b16 %v659, %v658
      %v780 = vpack.c.b16 %v661, %v660
      %v781 = vpack.c.b16 %v663, %v662
      %v782 = vpack.c.b16 %v665, %v664
      %v783 = vpack.c.b16 %v667, %v666
      %v784 = vpack.c.b16 %v669, %v668
      %v785 = vpack.c.b16 %v671, %v670
      %v786 = vpack.c.b16 %v673, %v672
      %v787 = vpack.c.b16 %v675, %v674
      %v788 = vpack.c.b16 %v677, %v676
      %v789 = vpack.c.b16 %v679, %v678
      %v790 = vpack.c.b16 %v681, %v680
      %v791 = vpack.c.b16 %v683, %v682
      %v792 = vpack.c.b16 %v685, %v684
      %v793 = vpack.c.b16 %v687, %v686
      %v794 = vpack.c.b16 %v689, %v688
      %v795 = vpack.c.b16 %v691, %v690
      %v796 = vpack.c.b16 %v693, %v692
      %v797 = vpack.c.b16 %v695, %v694
      %v798 = vpack.c.b16 %v697, %v696
      %v799 = vpack.c.b16 %v699, %v698
      %v800 = vpack.c.b16 %v701, %v700
      %v801 = vpack.c.b16 %v703, %v702
      %v802 = vpack.c.b16 %v705, %v704
      %v803 = vpack.c.b16 %v707, %v706
      %v804 = vpack.c.b16 %v709, %v708
      %v805 = vpack.c.b16 %v711, %v710
      %v806 = vpack.c.b16 %v713, %v712
      %v807 = vpack.c.b16 %v715, %v714
      %v808 = vpack.c.b16 %v717, %v716
      %v809 = vpack.c.b16 %v719, %v718
      %v810 = vpack.c.b16 %v721, %v720
      %v811 = vpack.c.b16 %v723, %v722
      %v812 = vpack.c.b16 %v725, %v724
      %v813 = vpack.c.b16 %v727, %v726
      %v814 = vpack.c.b16 %v729, %v728
      %v815 = vpack.c.b16 %v731, %v730
      %v816 = vpack.c.b16 %v733, %v732
      %v817 = vpack.c.b16 %v735, %v734
      %v818 = vpack.c.b16 %v737, %v736
      %v819 = vpack.c.b16 %v739, %v738
      %v820 = vpack.c.b16 %v741, %v740
      %v821 = vpack.c.b16 %v743, %v742
      %v822 = vpack.c.b16 %v745, %v744
      %v823 = vpack.c.b16 %v747, %v746
      %v824 = vpack.c.b16 %v749, %v748
      %v825 = vpack.c.b16 %v751, %v750
      %v826 = vpack.c.b16 %v753, %v752
      %v827 = vpack.c.b16 %v755, %v754
      %900 = vmatprep.subr.bf16.mxu0 0
      %901 = vmatpush1.bf16.msra.mxu0 %v763
      %902 = vmatprep.subr.bf16.mxu0 0
      %903 = vmatpush1.bf16.msra.mxu0 %v762
      %904 = vmatprep.subr.bf16.mxu0 0
      %905 = vmatpush1.bf16.msra.mxu0 %v761
      %906 = vmatprep.subr.bf16.mxu0 0
      %907 = vmatpush1.bf16.msra.mxu0 %v760
      %908 = vmatprep.subr.bf16.mxu0 0
      %909 = vmatpush1.bf16.msra.mxu0 %v759
      %910 = vmatprep.subr.bf16.mxu0 0
      %911 = vmatpush1.bf16.msra.mxu0 %v758
      %912 = vmatprep.subr.bf16.mxu0 0
      %913 = vmatpush1.bf16.msra.mxu0 %v757
      %914 = vmatprep.subr.bf16.mxu0 0
      %915 = vmatpush1.bf16.msra.mxu0 %v756
      %916 = vmatprep.subr.bf16.mxu0 0
      %917 = vmatpush2.bf16.msra.mxu0 %v771
      %918 = vmatprep.subr.bf16.mxu0 0
      %919 = vmatpush2.bf16.msra.mxu0 %v770
      %920 = vmatprep.subr.bf16.mxu0 0
      %921 = vmatpush2.bf16.msra.mxu0 %v769
      %922 = vmatprep.subr.bf16.mxu0 0
      %923 = vmatpush2.bf16.msra.mxu0 %v768
      %924 = vmatprep.subr.bf16.mxu0 0
      %925 = vmatpush2.bf16.msra.mxu0 %v767
      %926 = vmatprep.subr.bf16.mxu0 0
      %927 = vmatpush2.bf16.msra.mxu0 %v766
      %928 = vmatprep.subr.bf16.mxu0 0
      %929 = vmatpush2.bf16.msra.mxu0 %v765
      %930 = vmatprep.subr.bf16.mxu0 0
      %931 = vmatpush2.bf16.msra.mxu0 %v764
      %932 = vmatprep.mubr.bf16.mxu0 %v451
      %933 = vmatmul.mubr.bf16.gmra.mxu0 %v450
      %v934 = vpop.f32.mrf.mxu0
      %v935 = vadd.f32 0.0, %v934
      %v936 = vpop.f32.mrf.mxu0
      %v937 = vpop.f32.mrf.mxu0
      %v938 = vadd.f32 0.0, %v937
      %v939 = vpop.f32.mrf.mxu0
      %940 = vdwg.mxu0
      %941 = vmatprep.subr.bf16.mxu0 0
      %942 = vmatpush1.bf16.msra.mxu0 %v779
      %943 = vmatprep.subr.bf16.mxu0 0
      %944 = vmatpush1.bf16.msra.mxu0 %v778
      %945 = vmatprep.subr.bf16.mxu0 0
      %946 = vmatpush1.bf16.msra.mxu0 %v777
      %947 = vmatprep.subr.bf16.mxu0 0
      %948 = vmatpush1.bf16.msra.mxu0 %v776
      %949 = vmatprep.subr.bf16.mxu0 0
      %950 = vmatpush1.bf16.msra.mxu0 %v775
      %951 = vmatprep.subr.bf16.mxu0 0
      %952 = vmatpush1.bf16.msra.mxu0 %v774
      %953 = vmatprep.subr.bf16.mxu0 0
      %954 = vmatpush1.bf16.msra.mxu0 %v773
      %955 = vmatprep.subr.bf16.mxu0 0
      %956 = vmatpush1.bf16.msra.mxu0 %v772
      %957 = vmatprep.subr.bf16.mxu0 0
      %958 = vmatpush2.bf16.msra.mxu0 %v787
      %959 = vmatprep.subr.bf16.mxu0 0
      %960 = vmatpush2.bf16.msra.mxu0 %v786
      %961 = vmatprep.subr.bf16.mxu0 0
      %962 = vmatpush2.bf16.msra.mxu0 %v785
      %963 = vmatprep.subr.bf16.mxu0 0
      %964 = vmatpush2.bf16.msra.mxu0 %v784
      %965 = vmatprep.subr.bf16.mxu0 0
      %966 = vmatpush2.bf16.msra.mxu0 %v783
      %967 = vmatprep.subr.bf16.mxu0 0
      %968 = vmatpush2.bf16.msra.mxu0 %v782
      %969 = vmatprep.subr.bf16.mxu0 0
      %970 = vmatpush2.bf16.msra.mxu0 %v781
      %971 = vmatprep.subr.bf16.mxu0 0
      %972 = vmatpush2.bf16.msra.mxu0 %v780
      %973 = vmatprep.mubr.bf16.mxu0 %v453
      %974 = vmatmul.mubr.bf16.gmra.mxu0 %v452
      %v975 = vpop.f32.mrf.mxu0
      %v976 = vadd.f32 %v935, %v975
      %v977 = vpop.f32.mrf.mxu0
      %v978 = vpop.f32.mrf.mxu0
      %v979 = vadd.f32 %v938, %v978
      %v980 = vpop.f32.mrf.mxu0
      %981 = vdwg.mxu0
      %982 = vmatprep.subr.bf16.mxu0 0
      %983 = vmatpush1.bf16.msra.mxu0 %v795
      %984 = vmatprep.subr.bf16.mxu0 0
      %985 = vmatpush1.bf16.msra.mxu0 %v794
      %986 = vmatprep.subr.bf16.mxu0 0
      %987 = vmatpush1.bf16.msra.mxu0 %v793
      %988 = vmatprep.subr.bf16.mxu0 0
      %989 = vmatpush1.bf16.msra.mxu0 %v792
      %990 = vmatprep.subr.bf16.mxu0 0
      %991 = vmatpush1.bf16.msra.mxu0 %v791
      %992 = vmatprep.subr.bf16.mxu0 0
      %993 = vmatpush1.bf16.msra.mxu0 %v790
      %994 = vmatprep.subr.bf16.mxu0 0
      %995 = vmatpush1.bf16.msra.mxu0 %v789
      %996 = vmatprep.subr.bf16.mxu0 0
      %997 = vmatpush1.bf16.msra.mxu0 %v788
      %998 = vmatprep.subr.bf16.mxu0 0
      %999 = vmatpush2.bf16.msra.mxu0 %v803
      %1000 = vmatprep.subr.bf16.mxu0 0
      %1001 = vmatpush2.bf16.msra.mxu0 %v802
      %1002 = vmatprep.subr.bf16.mxu0 0
      %1003 = vmatpush2.bf16.msra.mxu0 %v801
      %1004 = vmatprep.subr.bf16.mxu0 0
      %1005 = vmatpush2.bf16.msra.mxu0 %v800
      %1006 = vmatprep.subr.bf16.mxu0 0
      %1007 = vmatpush2.bf16.msra.mxu0 %v799
      %1008 = vmatprep.subr.bf16.mxu0 0
      %1009 = vmatpush2.bf16.msra.mxu0 %v798
      %1010 = vmatprep.subr.bf16.mxu0 0
      %1011 = vmatpush2.bf16.msra.mxu0 %v797
      %1012 = vmatprep.subr.bf16.mxu0 0
      %1013 = vmatpush2.bf16.msra.mxu0 %v796
      %1014 = vmatprep.mubr.bf16.mxu0 %v455
      %1015 = vmatmul.mubr.bf16.gmra.mxu0 %v454
      %v1016 = vpop.f32.mrf.mxu0
      %v1017 = vadd.f32 %v976, %v1016
      %v1018 = vpop.f32.mrf.mxu0
      %v1019 = vpop.f32.mrf.mxu0
      %v1020 = vadd.f32 %v979, %v1019
      %v1021 = vpop.f32.mrf.mxu0
      %1022 = vdwg.mxu0
      %1023 = vmatprep.subr.bf16.mxu0 0
      %1024 = vmatpush1.bf16.msra.mxu0 %v811
      %1025 = vmatprep.subr.bf16.mxu0 0
      %1026 = vmatpush1.bf16.msra.mxu0 %v810
      %1027 = vmatprep.subr.bf16.mxu0 0
      %1028 = vmatpush1.bf16.msra.mxu0 %v809
      %1029 = vmatprep.subr.bf16.mxu0 0
      %1030 = vmatpush1.bf16.msra.mxu0 %v808
      %1031 = vmatprep.subr.bf16.mxu0 0
      %1032 = vmatpush1.bf16.msra.mxu0 %v807
      %1033 = vmatprep.subr.bf16.mxu0 0
      %1034 = vmatpush1.bf16.msra.mxu0 %v806
      %1035 = vmatprep.subr.bf16.mxu0 0
      %1036 = vmatpush1.bf16.msra.mxu0 %v805
      %1037 = vmatprep.subr.bf16.mxu0 0
      %1038 = vmatpush1.bf16.msra.mxu0 %v804
      %1039 = vmatprep.subr.bf16.mxu0 0
      %1040 = vmatpush2.bf16.msra.mxu0 %v819
      %1041 = vmatprep.subr.bf16.mxu0 0
      %1042 = vmatpush2.bf16.msra.mxu0 %v818
      %1043 = vmatprep.subr.bf16.mxu0 0
      %1044 = vmatpush2.bf16.msra.mxu0 %v817
      %1045 = vmatprep.subr.bf16.mxu0 0
      %1046 = vmatpush2.bf16.msra.mxu0 %v816
      %1047 = vmatprep.subr.bf16.mxu0 0
      %1048 = vmatpush2.bf16.msra.mxu0 %v815
      %1049 = vmatprep.subr.bf16.mxu0 0
      %1050 = vmatpush2.bf16.msra.mxu0 %v814
      %1051 = vmatprep.subr.bf16.mxu0 0
      %1052 = vmatpush2.bf16.msra.mxu0 %v813
      %1053 = vmatprep.subr.bf16.mxu0 0
      %1054 = vmatpush2.bf16.msra.mxu0 %v812
      %1055 = vmatprep.mubr.bf16.mxu0 %v457
      %1056 = vmatmul.mubr.bf16.gmra.mxu0 %v456
      %v1057 = vpop.f32.mrf.mxu0
      %v1058 = vadd.f32 %v1017, %v1057
      %v1059 = vpop.f32.mrf.mxu0
      %v1060 = vpop.f32.mrf.mxu0
      %v1061 = vadd.f32 %v1020, %v1060
      %v1062 = vpop.f32.mrf.mxu0
      %1063 = vdwg.mxu0
      %1064 = vmatprep.subr.bf16.mxu0 0
      %1065 = vmatpush1.bf16.msra.mxu0 %v827
      %1066 = vmatprep.subr.bf16.mxu0 0
      %1067 = vmatpush1.bf16.msra.mxu0 %v826
      %1068 = vmatprep.subr.bf16.mxu0 0
      %1069 = vmatpush1.bf16.msra.mxu0 %v825
      %1070 = vmatprep.subr.bf16.mxu0 0
      %1071 = vmatpush1.bf16.msra.mxu0 %v824
      %1072 = vmatprep.subr.bf16.mxu0 0
      %1073 = vmatpush1.bf16.msra.mxu0 %v823
      %1074 = vmatprep.subr.bf16.mxu0 0
      %1075 = vmatpush1.bf16.msra.mxu0 %v822
      %1076 = vmatprep.subr.bf16.mxu0 0
      %1077 = vmatpush1.bf16.msra.mxu0 %v821
      %1078 = vmatprep.subr.bf16.mxu0 0
      %1079 = vmatpush1.bf16.msra.mxu0 %v820
      %1080 = vmatprep.subr.bf16.mxu0 0
      %1081 = vmatpush2.bf16.msra.mxu0 0
      %1082 = vmatprep.subr.bf16.mxu0 0
      %1083 = vmatpush2.bf16.msra.mxu0 0
      %1084 = vmatprep.subr.bf16.mxu0 0
      %1085 = vmatpush2.bf16.msra.mxu0 0
      %1086 = vmatprep.subr.bf16.mxu0 0
      %1087 = vmatpush2.bf16.msra.mxu0 0
      %1088 = vmatprep.subr.bf16.mxu0 0
      %1089 = vmatpush2.bf16.msra.mxu0 0
      %1090 = vmatprep.subr.bf16.mxu0 0
      %1091 = vmatpush2.bf16.msra.mxu0 0
      %1092 = vmatprep.subr.bf16.mxu0 0
      %1093 = vmatpush2.bf16.msra.mxu0 0
      %1094 = vmatprep.subr.bf16.mxu0 0
      %1095 = vmatpush2.bf16.msra.mxu0 0
      %1096 = vmatprep.mubr.bf16.mxu0 0
      %1097 = vmatmul.mubr.bf16.gmra.mxu0 %v458
      %v1098 = vpop.f32.mrf.mxu0
      %v1099 = vadd.f32 %v1058, %v1098
      %v1100 = vpop.f32.mrf.mxu0
      %v1101 = vpop.f32.mrf.mxu0
      %v1102 = vadd.f32 %v1061, %v1101
      %v1103 = vpop.f32.mrf.mxu0
      %1104 = vdwg.mxu0
      %v1105 = vpack.c.bf16 %v1102, %v1099
      %v1107 = vunpack.c.l.b16 %v1105
      %v1108 = vunpack.c.h.b16 %v1105
      %v1109 = vpack.c.b16 %v1107, %v1107
      %v1110 = vpack.c.b16 %v1108, %v1108
      %1113 = vst [vmem:[%s249] sm:$0xf] %v1109
      %1114 = vst [vmem:[%s249 + $0x4] sm:$0xf] %v1110
      %v1115 = vld [vmem:[%s256] sm:$0xff]
      %v1116 = vadd.f32 %v1099, %v1102
      %v1117 = vadd.f32 %v1115, %v1116
      %1118 = vst [vmem:[%s256] sm:$0xff] %v1117
      %v1119 = vld [vmem:[%s260] sm:$0xff]
      %v1120 = vmul.f32 %v1099, %v1099
      %v1121 = vmul.f32 %v1102, %v1102
      %v1122 = vadd.f32 %v1120, %v1121
      %v1123 = vadd.f32 %v1119, %v1122
      %1124 = vst [vmem:[%s260] sm:$0xff] %v1123
      %s1125 = smul.u32 %s20, 2
      %s1126 = sadd.s32 %s1125, %s21
      %s1127 = smul.u32 2, %s1126
      %p1128 = scmp.lt.s32.totalorder %s1127, 7
      %s1129 = scalar_select %p1128, %s1127, 7
      %s1130 = smul.addr %s1129, 4
      %s1131 = scalar_lea.vmem %s2, %s1130
      %p1132 = scmp.lt.s32.totalorder %s20, 1
      %s1133 = scalar_select %p1132, %s20, 1
      %s1134 = smul.addr %s1133, 8
      %s1135 = scalar_lea.vmem %s3, %s1134
      %p1136 = scmp.lt.s32.totalorder %s20, 1
      %s1137 = scalar_select %p1136, %s20, 1
      %s1138 = smul.addr %s1137, 8
      %s1139 = scalar_lea.vmem %s4, %s1138
      // Predicated region
      $region33: #{dblock_forward.6} parent=27 // pred_check
        %p1140 = pneg %p101
      $region34: #{dblock_forward.6} parent=27 // pred_check_branch
        %1142 = sbr.rel (%p1140) target = $region36
      $region35: #{dblock_forward.6} parent=27 // pred_region
        %s1143 = smul.u32 %s20, 2
        %s1144 = sadd.s32 %s1143, %s21
        %s1145 = smul.u32 2, %s1144
      $region36: #{dblock_forward.6} parent=27 // pred_fallthru
        _
      // Predicated region
      $region37: #{dblock_forward.6} parent=27 // pred_check
        %p1146 = pneg %p127
      $region38: #{dblock_forward.6} parent=27 // pred_check_branch
        %1148 = sbr.rel (%p1146) target = $region40
      $region39: #{dblock_forward.6} parent=27 // pred_region
        _
      $region40: #{dblock_forward.6} parent=27 // pred_fallthru
        _
      // Predicated region
      $region41: #{dblock_forward.6} parent=27 // pred_check
        %p1149 = pneg %p153
      $region42: #{dblock_forward.6} parent=27 // pred_check_branch
        %1151 = sbr.rel (%p1149) target = $region44
      $region43: #{dblock_forward.6} parent=27 // pred_region
        _
      $region44: #{dblock_forward.6} parent=27 // pred_fallthru
        _
    $region28: #{dblock_forward.6} parent=5 // pred_fallthru
      _
    %p1152 = scmp.le.s32.totalorder 2, %s11
    // Predicated region
    $region45: #{dblock_forward.6} parent=5 // pred_check
      %p1153 = pneg %p1152
    $region46: #{dblock_forward.6} parent=5 // pred_check_branch
      %1155 = sbr.rel (%p1153) target = $region48
    $region47: #{dblock_forward.6} parent=5 // pred_region
      %s1156 = ssub.s32 %s11, 2
      // Predicated region
      $region49: #{dblock_forward.6} parent=47 // pred_check
        %p1157 = pneg %p107
      $region50: #{dblock_forward.6} parent=47 // pred_check_branch
        %1159 = sbr.rel (%p1157) target = $region52
      $region51: #{dblock_forward.6} parent=47 // pred_region
        %s1160 = smul.u32 %s22, 2
        %s1161 = sadd.s32 %s1160, %s23
        %s1162 = smul.u32 2, %s1161
        %p1163 = scmp.lt.s32.totalorder %s1162, 7
        %s1164 = scalar_select %p1163, %s1162, 7
        %s1165 = smul.addr %s1164, 4
        %s1166 = scalar_lea.vmem %s2, %s1165
      $region52: #{dblock_forward.6} parent=47 // pred_fallthru
        _
      // Predicated region
      $region53: #{dblock_forward.6} parent=47 // pred_check
        %p1167 = pneg %p133
      $region54: #{dblock_forward.6} parent=47 // pred_check_branch
        %1169 = sbr.rel (%p1167) target = $region56
      $region55: #{dblock_forward.6} parent=47 // pred_region
        %p1170 = scmp.lt.s32.totalorder %s22, 1
        %s1171 = scalar_select %p1170, %s22, 1
        %s1172 = smul.addr %s1171, 8
        %s1173 = scalar_lea.vmem %s3, %s1172
      $region56: #{dblock_forward.6} parent=47 // pred_fallthru
        _
      // Predicated region
      $region57: #{dblock_forward.6} parent=47 // pred_check
        %p1174 = pneg %p159
      $region58: #{dblock_forward.6} parent=47 // pred_check_branch
        %1176 = sbr.rel (%p1174) target = $region60
      $region59: #{dblock_forward.6} parent=47 // pred_region
        %p1177 = scmp.lt.s32.totalorder %s22, 1
        %s1178 = scalar_select %p1177, %s22, 1
        %s1179 = smul.addr %s1178, 8
        %s1180 = scalar_lea.vmem %s4, %s1179
      $region60: #{dblock_forward.6} parent=47 // pred_fallthru
        _
    $region48: #{dblock_forward.6} parent=5 // pred_fallthru
      _
  $region6: #{dblock_forward.6} parent=0 // loop_footer
    %s15 = sadd.s32 1, %s11
  $region7: #{dblock_forward.6} parent=0 // loop_footer_branch
    %10 = sbr.rel target = $region3
  $region8: #{dblock_forward.6} parent=0 // loop_exit
    _

// kernel: dblock_forward.7
$region0: #{dblock_forward.7}
  #allocation0 [shape = 'u32[]', space=smem, size = 0x4, offset = 0x4, fixed_abs, tag = 'smem constant byte address 0x4 - core index']
  #allocation1 [shape = 'u32[144,128]{1,0:T(1,128)}', space=vmem, size = 0x12000, scoped, tag = 'internal scratch']
  %s0 = inlined_call_operand.vmem [shape: bf16[64,128], index: 0, kind: input, shape index: {}]
  %s1 = inlined_call_operand.vmem [shape: f32[1,128], index: 1, kind: input, shape index: {}]
  %s2 = inlined_call_operand.vmem [shape: f32[1,128], index: 2, kind: input, shape index: {}]
  %s3 = inlined_call_operand.vmem [shape: f32[64,128], index: 3, kind: output, shape index: {}]
  %s4 = sld [smem:[#allocation0]]
  $region22: #{dblock_forward.7} parent=0
    _
  %s6 = ssub.s32 1, %s4
  %s7 = scalar_select 0, %s6, %s4
  // Predicated region
  $region2: #{dblock_forward.7} parent=0 // pred_check
    _
  $region3: #{dblock_forward.7} parent=0 // pred_check_branch
    %9 = sbr.rel (0) target = $region5
  $region4: #{dblock_forward.7} parent=0 // pred_region
    _
  $region5: #{dblock_forward.7} parent=0 // pred_fallthru
    _
  // Predicated region
  $region6: #{dblock_forward.7} parent=0 // pred_check
    _
  $region7: #{dblock_forward.7} parent=0 // pred_check_branch
    %11 = sbr.rel (0) target = $region9
  $region8: #{dblock_forward.7} parent=0 // pred_region
    _
  $region9: #{dblock_forward.7} parent=0 // pred_fallthru
    _
  // Predicated region
  $region10: #{dblock_forward.7} parent=0 // pred_check
    _
  $region11: #{dblock_forward.7} parent=0 // pred_check_branch
    %13 = sbr.rel (0) target = $region13
  $region12: #{dblock_forward.7} parent=0 // pred_region
    _
  $region13: #{dblock_forward.7} parent=0 // pred_fallthru
    _
  %v14 = vld [vmem:[%s0] sm:$0xf]
  %v15 = vld [vmem:[%s0 + $0x4] sm:$0xf]
  %v16 = vld [vmem:[%s0 + $0x8] sm:$0xf]
  %v17 = vld [vmem:[%s0 + $0xc] sm:$0xf]
  %v18 = vld [vmem:[%s0 + $0x10] sm:$0xf]
  %v19 = vld [vmem:[%s0 + $0x14] sm:$0xf]
  %v20 = vld [vmem:[%s0 + $0x18] sm:$0xf]
  %v21 = vld [vmem:[%s0 + $0x1c] sm:$0xf]
  %v22 = vunpack.c.l.bf16 %v14
  %v23 = vunpack.c.l.bf16 %v15
  %v24 = vunpack.c.l.bf16 %v16
  %v25 = vunpack.c.l.bf16 %v17
  %v26 = vunpack.c.l.bf16 %v18
  %v27 = vunpack.c.l.bf16 %v19
  %v28 = vunpack.c.l.bf16 %v20
  %v29 = vunpack.c.l.bf16 %v21
  %v30 = vld [vmem:[%s1] sm:$0x1]
  %v32 = vlaneseq
  %v33 = vshrl.u32 %v32, 7
  %v34 = vsub.s32 0, %v33
  %v35 = vrot.slane %v30, %v34
  %v37 = vmul.f32 %v22, %v35
  %v38 = vmul.f32 %v23, %v35
  %v39 = vmul.f32 %v24, %v35
  %v40 = vmul.f32 %v25, %v35
  %v41 = vmul.f32 %v26, %v35
  %v42 = vmul.f32 %v27, %v35
  %v43 = vmul.f32 %v28, %v35
  %v44 = vmul.f32 %v29, %v35
  %v45 = vld [vmem:[%s2] sm:$0x1]
  %v47 = vlaneseq
  %v48 = vshrl.u32 %v47, 7
  %v49 = vsub.s32 0, %v48
  %v50 = vrot.slane %v45, %v49
  %v52 = vadd.f32 %v37, %v50
  %v53 = vadd.f32 %v38, %v50
  %v54 = vadd.f32 %v39, %v50
  %v55 = vadd.f32 %v40, %v50
  %v56 = vadd.f32 %v41, %v50
  %v57 = vadd.f32 %v42, %v50
  %v58 = vadd.f32 %v43, %v50
  %v59 = vadd.f32 %v44, %v50
  %vm60 = vcmp.gt.f32.partialorder %v52, 0.0
  %vm61 = vcmp.gt.f32.partialorder %v53, 0.0
  %vm62 = vcmp.gt.f32.partialorder %v54, 0.0
  %vm63 = vcmp.gt.f32.partialorder %v55, 0.0
  %vm64 = vcmp.gt.f32.partialorder %v56, 0.0
  %vm65 = vcmp.gt.f32.partialorder %v57, 0.0
  %vm66 = vcmp.gt.f32.partialorder %v58, 0.0
  %vm67 = vcmp.gt.f32.partialorder %v59, 0.0
  %v68 = vmul.f32 %v52, 0.2
  %v69 = vmul.f32 %v53, 0.2
  %v70 = vmul.f32 %v54, 0.2
  %v71 = vmul.f32 %v55, 0.2
  %v72 = vmul.f32 %v56, 0.2
  %v73 = vmul.f32 %v57, 0.2
  %v74 = vmul.f32 %v58, 0.2
  %v75 = vmul.f32 %v59, 0.2
  %v76 = vsel %vm60, %v52, %v68
  %v77 = vsel %vm61, %v53, %v69
  %v78 = vsel %vm62, %v54, %v70
  %v79 = vsel %vm63, %v55, %v71
  %v80 = vsel %vm64, %v56, %v72
  %v81 = vsel %vm65, %v57, %v73
  %v82 = vsel %vm66, %v58, %v74
  %v83 = vsel %vm67, %v59, %v75
  %84 = vst [vmem:[%s3] sm:$0xff] %v76
  %85 = vst [vmem:[%s3 + $0x8] sm:$0xff] %v77
  %86 = vst [vmem:[%s3 + $0x10] sm:$0xff] %v78
  %87 = vst [vmem:[%s3 + $0x18] sm:$0xff] %v79
  %88 = vst [vmem:[%s3 + $0x20] sm:$0xff] %v80
  %89 = vst [vmem:[%s3 + $0x28] sm:$0xff] %v81
  %90 = vst [vmem:[%s3 + $0x30] sm:$0xff] %v82
  %91 = vst [vmem:[%s3 + $0x38] sm:$0xff] %v83
  // Predicated region
  $region14: #{dblock_forward.7} parent=0 // pred_check
    _
  $region15: #{dblock_forward.7} parent=0 // pred_check_branch
    %93 = sbr.rel (0) target = $region17
  $region16: #{dblock_forward.7} parent=0 // pred_region
    _
  $region17: #{dblock_forward.7} parent=0 // pred_fallthru
    _
  // Predicated region
  $region18: #{dblock_forward.7} parent=0 // pred_check
    _
  $region19: #{dblock_forward.7} parent=0 // pred_check_branch
    %95 = sbr.rel (0) target = $region21
  $region20: #{dblock_forward.7} parent=0 // pred_region
    _
  $region21: #{dblock_forward.7} parent=0 // pred_fallthru
    _

</llo_original>
